<compile_context>
chip_gen: v7x
topology: tpu7x:2x2x1
jax: 0.10.0
libtpu: 0.0.40
codegen_flags: <defaults>
</compile_context>

<pallas_src>
import functools

import jax
import jax.numpy as jnp
from jax.experimental import pallas as pl
from jax.experimental.pallas import tpu as pltpu


_LANE = 128


def _round_up(n, m):
    return ((n + m - 1) // m) * m


def _tpu_vmem_capacity_bytes():
    """Per-TensorCore VMEM capacity; conservative (v7x-class) fallback."""
    try:
        info = pltpu.get_tpu_info()
        cap = getattr(info, "vmem_capacity_bytes", None)
        if cap:
            return int(cap)
    except Exception:
        pass
    return 64 << 20


def _tile_vmem_bytes(bt, H, W, Cp, Crp, weight_bytes):
    """f32 working-set estimate for one batch tile, including the
    double-buffered input/output pipeline blocks and the resident weights."""
    hw = H * W
    f32 = 4
    act = bt * hw * Cp * f32                   # resident activation
    pad = bt * (H + 2) * (W + 2) * Cp * f32    # zero-padded relu(act) scratch
    tap = bt * hw * Cp * f32                   # one shifted-window temporary
    hid = bt * hw * Crp * f32                  # hidden (res_h) temporary
    io = 2 * (2 * bt * hw * Cp * f32)          # 2x input + 2x output buffers
    return act + pad + tap + hid + io + weight_bytes


def _pick_batch_tile(B, H, W, Cp, Crp, weight_bytes, budget, prefer_even_nb):
    divisors = sorted(d for d in range(1, B + 1) if B % d == 0)
    fitting = [d for d in divisors
               if _tile_vmem_bytes(d, H, W, Cp, Crp, weight_bytes) <= budget]
    if not fitting:
        # TODO(synk): add a spatial (H/W) tiling fallback for very large images.
        raise ValueError(
            "ResidualStack: even a single-image batch tile exceeds the VMEM "
            f"budget ({budget} bytes); spatial tiling is not implemented.")
    if prefer_even_nb:
        # v7x-class: keep nb even (and >= 2) so both TensorCores stay busy.
        even = [d for d in fitting if (B // d) >= 2 and (B // d) % 2 == 0]
        if even:
            return max(even)
    return max(fitting)            # single TC: biggest tile = biggest MXU M


def residual_stack_kernel(x_ref, w3_ref, w1_ref, o_ref, act_ref, pad_ref, *,
                          Bt, H, W, Cp, Crp, compute_dtype):
    """One (batch_tile, layer) grid point of the fused residual stack.

    x_ref  : (Bt, H, W, Cp) f32      lane-padded input tile
    w3_ref : (L*9, Cp, Crp)          per-tap 3x3 weights, all layers resident
    w1_ref : (L, Crp, Cp)            1x1 weights, all layers resident
    o_ref  : (1, Bt*H*W, Cp)         lane-dense output block
    act_ref: (Bt*H*W, Cp) f32        resident activation across the layer axis
    pad_ref: (Bt, H+2, W+2, Cp) f32  zero-padded relu(activation) scratch
    """
    l = pl.program_id(1)
    M = Bt * H * W

    @pl.when(l == 0)
    def _init():
        act_ref[...] = x_ref[...].reshape(M, Cp).astype(jnp.float32)
        pad_ref[...] = jnp.zeros_like(pad_ref)   # border stays 0 every layer

    act = act_ref[...]                                           # (M, Cp) f32

    # relu(x) written into the interior of the zero-padded scratch
    # (relu(pad0(x)) == pad0(relu(x)) because relu(0) == 0).
    pad_ref[:, 1:H + 1, 1:W + 1, :] = (
        jnp.maximum(act, 0.0).reshape(Bt, H, W, Cp))

    # 3x3 "SAME" conv as 9 accumulating MXU dots over shifted windows:
    # bf16 operands, f32 accumulation, no materialized im2col slab.
    h = jnp.zeros((M, Crp), jnp.float32)
    for dy in range(3):
        for dx in range(3):
            tap = (pad_ref[:, dy:dy + H, dx:dx + W, :]
                   .astype(compute_dtype).reshape(M, Cp))
            h = h + jnp.dot(tap, w3_ref[l * 9 + dy * 3 + dx],
                            preferred_element_type=jnp.float32)

    hid = jnp.maximum(h, 0.0).astype(compute_dtype)              # (M, Crp)
    y = jnp.dot(hid, w1_ref[l], preferred_element_type=jnp.float32)  # (M, Cp)

    new_act = act + y
    act_ref[...] = new_act

    @pl.when(l == pl.num_programs(1) - 1)
    def _finalize():
        # Final ReLU; last dim Cp is a multiple of 128 -> unmasked vst stream.
        o_ref[0] = jnp.maximum(new_act, 0.0).astype(o_ref.dtype)


def residual_stack_forward(x, params, *, batch_tile=None,
                           compute_dtype=jnp.bfloat16):
    """x: (B, H, W, C) NHWC.  params: list of (w3 (3,3,C,Cres), w1 (Cres,C))."""
    B, H, W, C = x.shape
    L = len(params)
    assert L >= 1
    cres = params[0][0].shape[-1]
    for w3, w1 in params:
        assert w3.shape == (3, 3, C, cres), "all layers must share shapes"
        assert w1.shape == (cres, C), "residual add requires Cout == Cin"

    # Lane-dense channel padding.  Zero weight rows/cols make this an exact
    # no-op: padded activation channels stay 0 through every layer and the
    # final ReLU, and are sliced away on the way out.
    Cp = _round_up(C, _LANE)
    Crp = _round_up(cres, _LANE)

    xp = jnp.pad(x.astype(jnp.float32),
                 ((0, 0), (0, 0), (0, 0), (0, Cp - C)))

    w3_taps, w1s = [], []
    for w3, w1 in params:
        w3p = jnp.pad(w3, ((0, 0), (0, 0), (0, Cp - C), (0, Crp - cres)))
        w3_taps.append(w3p.reshape(9, Cp, Crp))
        w1s.append(jnp.pad(w1, ((0, Crp - cres), (0, Cp - C))))
    w3_all = jnp.concatenate(w3_taps, axis=0).astype(compute_dtype)  # (L*9,Cp,Crp)
    w1_all = jnp.stack(w1s).astype(compute_dtype)                    # (L,Crp,Cp)
    weight_bytes = int((w3_all.size + w1_all.size) * w3_all.dtype.itemsize)

    # Generation-aware VMEM budgets: ~40 MiB scoped on v7x-class (64 MiB/TC),
    # ~96 MiB on v5e/v6e-class (128 MiB/TC).
    vmem_cap = _tpu_vmem_capacity_bytes()
    multi_tc = vmem_cap <= (64 << 20)
    scoped_limit = min((40 << 20) if multi_tc else (96 << 20),
                       int(vmem_cap * 0.75))
    budget = int(scoped_limit * 0.7)      # headroom for compiler scratch

    if batch_tile is None:
        Bt = _pick_batch_tile(B, H, W, Cp, Crp, weight_bytes, budget,
                              prefer_even_nb=multi_tc)
    else:
        Bt = batch_tile
    assert B % Bt == 0, "batch_tile must divide the batch"
    nb = B // Bt

    kern = functools.partial(residual_stack_kernel, Bt=Bt, H=H, W=W, Cp=Cp,
                             Crp=Crp, compute_dtype=compute_dtype)

    out = pl.pallas_call(
        kern,
        out_shape=jax.ShapeDtypeStruct((nb, Bt * H * W, Cp), x.dtype),
        grid=(nb, L),
        in_specs=[
            pl.BlockSpec((Bt, H, W, Cp), lambda b, l: (b, 0, 0, 0)),
            # All layers' weights resident in VMEM: constant block index ->
            # fetched once, never re-DMA'd across the grid.
            pl.BlockSpec((L * 9, Cp, Crp), lambda b, l: (0, 0, 0)),
            pl.BlockSpec((L, Crp, Cp), lambda b, l: (0, 0, 0)),
        ],
        out_specs=pl.BlockSpec((1, Bt * H * W, Cp), lambda b, l: (b, 0, 0)),
        scratch_shapes=[
            pltpu.VMEM((Bt * H * W, Cp), jnp.float32),
            pltpu.VMEM((Bt, H + 2, W + 2, Cp), jnp.float32),
        ],
        compiler_params=pltpu.CompilerParams(
            dimension_semantics=("parallel", "arbitrary"),
            vmem_limit_bytes=int(scoped_limit)),
    )(xp, w3_all, w1_all)

    return out.reshape(B, H, W, Cp)[..., :C]


def residual_stack_reference(x, params):
    """Pure-JAX reference (NHWC) mirroring the PyTorch module."""
    for w3, w1 in params:
        r = jax.nn.relu(x)
        h = jax.lax.conv_general_dilated(
            r, w3, window_strides=(1, 1), padding="SAME",
            dimension_numbers=("NHWC", "HWIO", "NHWC"))
        h = jax.nn.relu(h)
        y = jax.lax.conv_general_dilated(
            h, w1.reshape(1, 1, *w1.shape), window_strides=(1, 1),
            padding="SAME", dimension_numbers=("NHWC", "HWIO", "NHWC"))
        x = x + y
    return jax.nn.relu(x)


if __name__ == "__main__":
    # Module config: in_dim == hidden_dim (required for the residual add).
    in_dim = hidden_dim = 8
    res_hidden_dim = 4
    num_res_layers = 2
    B, H, W = 2, 8, 8

    key = jax.random.PRNGKey(0)
    kx, *kws = jax.random.split(key, 1 + 2 * num_res_layers)

    x = jax.random.normal(kx, (B, H, W, in_dim), dtype=jnp.float32)

    params = []
    for li in range(num_res_layers):
        w3 = 0.1 * jax.random.normal(
            kws[2 * li], (3, 3, in_dim, res_hidden_dim), dtype=jnp.float32)
        w1 = 0.1 * jax.random.normal(
            kws[2 * li + 1], (res_hidden_dim, hidden_dim), dtype=jnp.float32)
        params.append((w3, w1))

    ref = residual_stack_reference(x, params)

    # Default (bf16 MXU operands, f32 accumulation) path.
    out_bf16 = jax.block_until_ready(residual_stack_forward(x, params))
    assert out_bf16.shape == (B, H, W, hidden_dim)
    assert jnp.allclose(out_bf16, ref, atol=3e-2, rtol=3e-2), \
        "bf16 path mismatch vs reference"

    # Exact f32 path for the strict correctness check.
    out_f32 = jax.block_until_ready(
        residual_stack_forward(x, params, compute_dtype=jnp.float32))
    assert out_f32.shape == (B, H, W, hidden_dim)
    assert jnp.allclose(out_f32, ref, atol=1e-5, rtol=1e-5), \
        "f32 path mismatch vs reference"

    print("KERNEL_OK")
</pallas_src>

<mosaic_0001>
module attributes {stable_mosaic.version = 11 : i64} {
  func.func @residual_stack_kernel(%arg0: i32, %arg1: i32, %arg2: memref<1x8x8x128xf32, #tpu.memory_space<vmem>>, %arg3: memref<18x128x128xbf16, #tpu.memory_space<vmem>>, %arg4: memref<2x128x128xbf16, #tpu.memory_space<vmem>>, %arg5: memref<1x64x128xf32, #tpu.memory_space<vmem>>, %arg6: memref<64x128xf32, #tpu.memory_space<vmem>>, %arg7: memref<1x10x10x128xf32, #tpu.memory_space<vmem>>) attributes {dimension_semantics = [#tpu.dimension_semantics<parallel>, #tpu.dimension_semantics<arbitrary>], iteration_bounds = array<i64: 2, 2>, scalar_prefetch = 0 : i64, scratch_operands = 2 : i64, tpu.core_type = #tpu.core_type<tc>, window_params = [{transform_indices = @transform_0, window_bounds = array<i64: 1, 8, 8, 128>}, {pipeline_mode = #tpu.pipeline_mode<synchronous>, transform_indices = @transform_1, window_bounds = array<i64: 18, 128, 128>}, {pipeline_mode = #tpu.pipeline_mode<synchronous>, transform_indices = @transform_2, window_bounds = array<i64: 2, 128, 128>}, {transform_indices = @transform_3, window_bounds = array<i64: 1, 64, 128>}]} {
    %c0_i32 = arith.constant 0 : i32
    %0 = arith.cmpi eq, %arg1, %c0_i32 : i32
    %1 = arith.extui %0 : i1 to i32
    %c0_i32_0 = arith.constant 0 : i32
    %2 = arith.cmpi ne, %1, %c0_i32_0 : i32
    scf.if %2 {
      %c0_98 = arith.constant 0 : index
      %c0_99 = arith.constant 0 : index
      %c0_100 = arith.constant 0 : index
      %c0_101 = arith.constant 0 : index
      %120 = vector.load %arg2[%c0_98, %c0_99, %c0_100, %c0_101] : memref<1x8x8x128xf32, #tpu.memory_space<vmem>>, vector<1x8x8x128xf32>
      %121 = vector.shape_cast %120 : vector<1x8x8x128xf32> to vector<64x128xf32>
      %c0_102 = arith.constant 0 : index
      %c0_103 = arith.constant 0 : index
      %122 = vector.load %arg6[%c0_102, %c0_103] : memref<64x128xf32, #tpu.memory_space<vmem>>, vector<64x128xf32>
      tpu.vector_store %arg6[%c0_102, %c0_103], %121 {strides = array<i32>} : memref<64x128xf32, #tpu.memory_space<vmem>>, vector<64x128xf32>,
      %cst_104 = arith.constant 0.000000e+00 : f32
      %123 = vector.broadcast %cst_104 : f32 to vector<1x10x10x128xf32>
      %c0_105 = arith.constant 0 : index
      %c0_106 = arith.constant 0 : index
      %c0_107 = arith.constant 0 : index
      %c0_108 = arith.constant 0 : index
      %124 = vector.load %arg7[%c0_105, %c0_106, %c0_107, %c0_108] : memref<1x10x10x128xf32, #tpu.memory_space<vmem>>, vector<1x10x10x128xf32>
      tpu.vector_store %arg7[%c0_105, %c0_106, %c0_107, %c0_108], %123 {strides = array<i32>} : memref<1x10x10x128xf32, #tpu.memory_space<vmem>>, vector<1x10x10x128xf32>,
    } else {
    }
    %c0 = arith.constant 0 : index
    %c0_1 = arith.constant 0 : index
    %3 = vector.load %arg6[%c0, %c0_1] : memref<64x128xf32, #tpu.memory_space<vmem>>, vector<64x128xf32>
    %cst = arith.constant 0.000000e+00 : f32
    %4 = vector.broadcast %cst : f32 to vector<64x128xf32>
    %5 = arith.maximumf %3, %4 : vector<64x128xf32>
    %6 = vector.shape_cast %5 : vector<64x128xf32> to vector<1x8x8x128xf32>
    %c0_2 = arith.constant 0 : index
    %c1 = arith.constant 1 : index
    %c1_3 = arith.constant 1 : index
    %c0_4 = arith.constant 0 : index
    %7 = vector.load %arg7[%c0_2, %c1, %c1_3, %c0_4] : memref<1x10x10x128xf32, #tpu.memory_space<vmem>>, vector<1x8x8x128xf32>
    tpu.vector_store %arg7[%c0_2, %c1, %c1_3, %c0_4], %6 {strides = array<i32>} : memref<1x10x10x128xf32, #tpu.memory_space<vmem>>, vector<1x8x8x128xf32>,
    %cst_5 = arith.constant 0.000000e+00 : f32
    %8 = vector.broadcast %cst_5 : f32 to vector<64x128xf32>
    %c0_6 = arith.constant 0 : index
    %c0_7 = arith.constant 0 : index
    %c0_8 = arith.constant 0 : index
    %c0_9 = arith.constant 0 : index
    %9 = vector.load %arg7[%c0_6, %c0_7, %c0_8, %c0_9] : memref<1x10x10x128xf32, #tpu.memory_space<vmem>>, vector<1x8x8x128xf32>
    %10 = arith.truncf %9 : vector<1x8x8x128xf32> to vector<1x8x8x128xbf16>
    %11 = vector.shape_cast %10 : vector<1x8x8x128xbf16> to vector<64x128xbf16>
    %c9_i32 = arith.constant 9 : i32
    %12 = arith.muli %arg1, %c9_i32 : i32
    %c0_i32_10 = arith.constant 0 : i32
    %13 = arith.addi %12, %c0_i32_10 : i32
    %c0_i32_11 = arith.constant 0 : i32
    %14 = arith.addi %13, %c0_i32_11 : i32
    %15 = arith.index_cast %14 : i32 to index
    %c0_12 = arith.constant 0 : index
    %c0_13 = arith.constant 0 : index
    %16 = vector.load %arg3[%15, %c0_12, %c0_13] : memref<18x128x128xbf16, #tpu.memory_space<vmem>>, vector<1x128x128xbf16>
    %17 = vector.shape_cast %16 : vector<1x128x128xbf16> to vector<128x128xbf16>
    %cst_14 = arith.constant dense<0.000000e+00> : vector<64x128xf32>
    %18 = tpu.matmul %11, %17, %cst_14 {dimension_numbers = #tpu.dot_dimension_numbers<[1], [0], [0], [1], [0, 0, 1, 1], [], []>} : vector<64x128xbf16>, vector<128x128xbf16>, vector<64x128xf32> -> vector<64x128xf32>
    %19 = arith.addf %8, %18 : vector<64x128xf32>
    %c0_15 = arith.constant 0 : index
    %c0_16 = arith.constant 0 : index
    %c1_17 = arith.constant 1 : index
    %c0_18 = arith.constant 0 : index
    %20 = vector.load %arg7[%c0_15, %c0_16, %c1_17, %c0_18] : memref<1x10x10x128xf32, #tpu.memory_space<vmem>>, vector<1x8x8x128xf32>
    %21 = arith.truncf %20 : vector<1x8x8x128xf32> to vector<1x8x8x128xbf16>
    %22 = vector.shape_cast %21 : vector<1x8x8x128xbf16> to vector<64x128xbf16>
    %c9_i32_19 = arith.constant 9 : i32
    %23 = arith.muli %arg1, %c9_i32_19 : i32
    %c0_i32_20 = arith.constant 0 : i32
    %24 = arith.addi %23, %c0_i32_20 : i32
    %c1_i32 = arith.constant 1 : i32
    %25 = arith.addi %24, %c1_i32 : i32
    %26 = arith.index_cast %25 : i32 to index
    %c0_21 = arith.constant 0 : index
    %c0_22 = arith.constant 0 : index
    %27 = vector.load %arg3[%26, %c0_21, %c0_22] : memref<18x128x128xbf16, #tpu.memory_space<vmem>>, vector<1x128x128xbf16>
    %28 = vector.shape_cast %27 : vector<1x128x128xbf16> to vector<128x128xbf16>
    %cst_23 = arith.constant dense<0.000000e+00> : vector<64x128xf32>
    %29 = tpu.matmul %22, %28, %cst_23 {dimension_numbers = #tpu.dot_dimension_numbers<[1], [0], [0], [1], [0, 0, 1, 1], [], []>} : vector<64x128xbf16>, vector<128x128xbf16>, vector<64x128xf32> -> vector<64x128xf32>
    %30 = arith.addf %19, %29 : vector<64x128xf32>
    %c0_24 = arith.constant 0 : index
    %c0_25 = arith.constant 0 : index
    %c2 = arith.constant 2 : index
    %c0_26 = arith.constant 0 : index
    %31 = vector.load %arg7[%c0_24, %c0_25, %c2, %c0_26] : memref<1x10x10x128xf32, #tpu.memory_space<vmem>>, vector<1x8x8x128xf32>
    %32 = arith.truncf %31 : vector<1x8x8x128xf32> to vector<1x8x8x128xbf16>
    %33 = vector.shape_cast %32 : vector<1x8x8x128xbf16> to vector<64x128xbf16>
    %c9_i32_27 = arith.constant 9 : i32
    %34 = arith.muli %arg1, %c9_i32_27 : i32
    %c0_i32_28 = arith.constant 0 : i32
    %35 = arith.addi %34, %c0_i32_28 : i32
    %c2_i32 = arith.constant 2 : i32
    %36 = arith.addi %35, %c2_i32 : i32
    %37 = arith.index_cast %36 : i32 to index
    %c0_29 = arith.constant 0 : index
    %c0_30 = arith.constant 0 : index
    %38 = vector.load %arg3[%37, %c0_29, %c0_30] : memref<18x128x128xbf16, #tpu.memory_space<vmem>>, vector<1x128x128xbf16>
    %39 = vector.shape_cast %38 : vector<1x128x128xbf16> to vector<128x128xbf16>
    %cst_31 = arith.constant dense<0.000000e+00> : vector<64x128xf32>
    %40 = tpu.matmul %33, %39, %cst_31 {dimension_numbers = #tpu.dot_dimension_numbers<[1], [0], [0], [1], [0, 0, 1, 1], [], []>} : vector<64x128xbf16>, vector<128x128xbf16>, vector<64x128xf32> -> vector<64x128xf32>
    %41 = arith.addf %30, %40 : vector<64x128xf32>
    %c0_32 = arith.constant 0 : index
    %c1_33 = arith.constant 1 : index
    %c0_34 = arith.constant 0 : index
    %c0_35 = arith.constant 0 : index
    %42 = vector.load %arg7[%c0_32, %c1_33, %c0_34, %c0_35] : memref<1x10x10x128xf32, #tpu.memory_space<vmem>>, vector<1x8x8x128xf32>
    %43 = arith.truncf %42 : vector<1x8x8x128xf32> to vector<1x8x8x128xbf16>
    %44 = vector.shape_cast %43 : vector<1x8x8x128xbf16> to vector<64x128xbf16>
    %c9_i32_36 = arith.constant 9 : i32
    %45 = arith.muli %arg1, %c9_i32_36 : i32
    %c3_i32 = arith.constant 3 : i32
    %46 = arith.addi %45, %c3_i32 : i32
    %c0_i32_37 = arith.constant 0 : i32
    %47 = arith.addi %46, %c0_i32_37 : i32
    %48 = arith.index_cast %47 : i32 to index
    %c0_38 = arith.constant 0 : index
    %c0_39 = arith.constant 0 : index
    %49 = vector.load %arg3[%48, %c0_38, %c0_39] : memref<18x128x128xbf16, #tpu.memory_space<vmem>>, vector<1x128x128xbf16>
    %50 = vector.shape_cast %49 : vector<1x128x128xbf16> to vector<128x128xbf16>
    %cst_40 = arith.constant dense<0.000000e+00> : vector<64x128xf32>
    %51 = tpu.matmul %44, %50, %cst_40 {dimension_numbers = #tpu.dot_dimension_numbers<[1], [0], [0], [1], [0, 0, 1, 1], [], []>} : vector<64x128xbf16>, vector<128x128xbf16>, vector<64x128xf32> -> vector<64x128xf32>
    %52 = arith.addf %41, %51 : vector<64x128xf32>
    %c0_41 = arith.constant 0 : index
    %c1_42 = arith.constant 1 : index
    %c1_43 = arith.constant 1 : index
    %c0_44 = arith.constant 0 : index
    %53 = vector.load %arg7[%c0_41, %c1_42, %c1_43, %c0_44] : memref<1x10x10x128xf32, #tpu.memory_space<vmem>>, vector<1x8x8x128xf32>
    %54 = arith.truncf %53 : vector<1x8x8x128xf32> to vector<1x8x8x128xbf16>
    %55 = vector.shape_cast %54 : vector<1x8x8x128xbf16> to vector<64x128xbf16>
    %c9_i32_45 = arith.constant 9 : i32
    %56 = arith.muli %arg1, %c9_i32_45 : i32
    %c3_i32_46 = arith.constant 3 : i32
    %57 = arith.addi %56, %c3_i32_46 : i32
    %c1_i32_47 = arith.constant 1 : i32
    %58 = arith.addi %57, %c1_i32_47 : i32
    %59 = arith.index_cast %58 : i32 to index
    %c0_48 = arith.constant 0 : index
    %c0_49 = arith.constant 0 : index
    %60 = vector.load %arg3[%59, %c0_48, %c0_49] : memref<18x128x128xbf16, #tpu.memory_space<vmem>>, vector<1x128x128xbf16>
    %61 = vector.shape_cast %60 : vector<1x128x128xbf16> to vector<128x128xbf16>
    %cst_50 = arith.constant dense<0.000000e+00> : vector<64x128xf32>
    %62 = tpu.matmul %55, %61, %cst_50 {dimension_numbers = #tpu.dot_dimension_numbers<[1], [0], [0], [1], [0, 0, 1, 1], [], []>} : vector<64x128xbf16>, vector<128x128xbf16>, vector<64x128xf32> -> vector<64x128xf32>
    %63 = arith.addf %52, %62 : vector<64x128xf32>
    %c0_51 = arith.constant 0 : index
    %c1_52 = arith.constant 1 : index
    %c2_53 = arith.constant 2 : index
    %c0_54 = arith.constant 0 : index
    %64 = vector.load %arg7[%c0_51, %c1_52, %c2_53, %c0_54] : memref<1x10x10x128xf32, #tpu.memory_space<vmem>>, vector<1x8x8x128xf32>
    %65 = arith.truncf %64 : vector<1x8x8x128xf32> to vector<1x8x8x128xbf16>
    %66 = vector.shape_cast %65 : vector<1x8x8x128xbf16> to vector<64x128xbf16>
    %c9_i32_55 = arith.constant 9 : i32
    %67 = arith.muli %arg1, %c9_i32_55 : i32
    %c3_i32_56 = arith.constant 3 : i32
    %68 = arith.addi %67, %c3_i32_56 : i32
    %c2_i32_57 = arith.constant 2 : i32
    %69 = arith.addi %68, %c2_i32_57 : i32
    %70 = arith.index_cast %69 : i32 to index
    %c0_58 = arith.constant 0 : index
    %c0_59 = arith.constant 0 : index
    %71 = vector.load %arg3[%70, %c0_58, %c0_59] : memref<18x128x128xbf16, #tpu.memory_space<vmem>>, vector<1x128x128xbf16>
    %72 = vector.shape_cast %71 : vector<1x128x128xbf16> to vector<128x128xbf16>
    %cst_60 = arith.constant dense<0.000000e+00> : vector<64x128xf32>
    %73 = tpu.matmul %66, %72, %cst_60 {dimension_numbers = #tpu.dot_dimension_numbers<[1], [0], [0], [1], [0, 0, 1, 1], [], []>} : vector<64x128xbf16>, vector<128x128xbf16>, vector<64x128xf32> -> vector<64x128xf32>
    %74 = arith.addf %63, %73 : vector<64x128xf32>
    %c0_61 = arith.constant 0 : index
    %c2_62 = arith.constant 2 : index
    %c0_63 = arith.constant 0 : index
    %c0_64 = arith.constant 0 : index
    %75 = vector.load %arg7[%c0_61, %c2_62, %c0_63, %c0_64] : memref<1x10x10x128xf32, #tpu.memory_space<vmem>>, vector<1x8x8x128xf32>
    %76 = arith.truncf %75 : vector<1x8x8x128xf32> to vector<1x8x8x128xbf16>
    %77 = vector.shape_cast %76 : vector<1x8x8x128xbf16> to vector<64x128xbf16>
    %c9_i32_65 = arith.constant 9 : i32
    %78 = arith.muli %arg1, %c9_i32_65 : i32
    %c6_i32 = arith.constant 6 : i32
    %79 = arith.addi %78, %c6_i32 : i32
    %c0_i32_66 = arith.constant 0 : i32
    %80 = arith.addi %79, %c0_i32_66 : i32
    %81 = arith.index_cast %80 : i32 to index
    %c0_67 = arith.constant 0 : index
    %c0_68 = arith.constant 0 : index
    %82 = vector.load %arg3[%81, %c0_67, %c0_68] : memref<18x128x128xbf16, #tpu.memory_space<vmem>>, vector<1x128x128xbf16>
    %83 = vector.shape_cast %82 : vector<1x128x128xbf16> to vector<128x128xbf16>
    %cst_69 = arith.constant dense<0.000000e+00> : vector<64x128xf32>
    %84 = tpu.matmul %77, %83, %cst_69 {dimension_numbers = #tpu.dot_dimension_numbers<[1], [0], [0], [1], [0, 0, 1, 1], [], []>} : vector<64x128xbf16>, vector<128x128xbf16>, vector<64x128xf32> -> vector<64x128xf32>
    %85 = arith.addf %74, %84 : vector<64x128xf32>
    %c0_70 = arith.constant 0 : index
    %c2_71 = arith.constant 2 : index
    %c1_72 = arith.constant 1 : index
    %c0_73 = arith.constant 0 : index
    %86 = vector.load %arg7[%c0_70, %c2_71, %c1_72, %c0_73] : memref<1x10x10x128xf32, #tpu.memory_space<vmem>>, vector<1x8x8x128xf32>
    %87 = arith.truncf %86 : vector<1x8x8x128xf32> to vector<1x8x8x128xbf16>
    %88 = vector.shape_cast %87 : vector<1x8x8x128xbf16> to vector<64x128xbf16>
    %c9_i32_74 = arith.constant 9 : i32
    %89 = arith.muli %arg1, %c9_i32_74 : i32
    %c6_i32_75 = arith.constant 6 : i32
    %90 = arith.addi %89, %c6_i32_75 : i32
    %c1_i32_76 = arith.constant 1 : i32
    %91 = arith.addi %90, %c1_i32_76 : i32
    %92 = arith.index_cast %91 : i32 to index
    %c0_77 = arith.constant 0 : index
    %c0_78 = arith.constant 0 : index
    %93 = vector.load %arg3[%92, %c0_77, %c0_78] : memref<18x128x128xbf16, #tpu.memory_space<vmem>>, vector<1x128x128xbf16>
    %94 = vector.shape_cast %93 : vector<1x128x128xbf16> to vector<128x128xbf16>
    %cst_79 = arith.constant dense<0.000000e+00> : vector<64x128xf32>
    %95 = tpu.matmul %88, %94, %cst_79 {dimension_numbers = #tpu.dot_dimension_numbers<[1], [0], [0], [1], [0, 0, 1, 1], [], []>} : vector<64x128xbf16>, vector<128x128xbf16>, vector<64x128xf32> -> vector<64x128xf32>
    %96 = arith.addf %85, %95 : vector<64x128xf32>
    %c0_80 = arith.constant 0 : index
    %c2_81 = arith.constant 2 : index
    %c2_82 = arith.constant 2 : index
    %c0_83 = arith.constant 0 : index
    %97 = vector.load %arg7[%c0_80, %c2_81, %c2_82, %c0_83] : memref<1x10x10x128xf32, #tpu.memory_space<vmem>>, vector<1x8x8x128xf32>
    %98 = arith.truncf %97 : vector<1x8x8x128xf32> to vector<1x8x8x128xbf16>
    %99 = vector.shape_cast %98 : vector<1x8x8x128xbf16> to vector<64x128xbf16>
    %c9_i32_84 = arith.constant 9 : i32
    %100 = arith.muli %arg1, %c9_i32_84 : i32
    %c6_i32_85 = arith.constant 6 : i32
    %101 = arith.addi %100, %c6_i32_85 : i32
    %c2_i32_86 = arith.constant 2 : i32
    %102 = arith.addi %101, %c2_i32_86 : i32
    %103 = arith.index_cast %102 : i32 to index
    %c0_87 = arith.constant 0 : index
    %c0_88 = arith.constant 0 : index
    %104 = vector.load %arg3[%103, %c0_87, %c0_88] : memref<18x128x128xbf16, #tpu.memory_space<vmem>>, vector<1x128x128xbf16>
    %105 = vector.shape_cast %104 : vector<1x128x128xbf16> to vector<128x128xbf16>
    %cst_89 = arith.constant dense<0.000000e+00> : vector<64x128xf32>
    %106 = tpu.matmul %99, %105, %cst_89 {dimension_numbers = #tpu.dot_dimension_numbers<[1], [0], [0], [1], [0, 0, 1, 1], [], []>} : vector<64x128xbf16>, vector<128x128xbf16>, vector<64x128xf32> -> vector<64x128xf32>
    %107 = arith.addf %96, %106 : vector<64x128xf32>
    %cst_90 = arith.constant 0.000000e+00 : f32
    %108 = vector.broadcast %cst_90 : f32 to vector<64x128xf32>
    %109 = arith.maximumf %107, %108 : vector<64x128xf32>
    %110 = arith.truncf %109 : vector<64x128xf32> to vector<64x128xbf16>
    %111 = arith.index_cast %arg1 : i32 to index
    %c0_91 = arith.constant 0 : index
    %c0_92 = arith.constant 0 : index
    %112 = vector.load %arg4[%111, %c0_91, %c0_92] : memref<2x128x128xbf16, #tpu.memory_space<vmem>>, vector<1x128x128xbf16>
    %113 = vector.shape_cast %112 : vector<1x128x128xbf16> to vector<128x128xbf16>
    %cst_93 = arith.constant dense<0.000000e+00> : vector<64x128xf32>
    %114 = tpu.matmul %110, %113, %cst_93 {dimension_numbers = #tpu.dot_dimension_numbers<[1], [0], [0], [1], [0, 0, 1, 1], [], []>} : vector<64x128xbf16>, vector<128x128xbf16>, vector<64x128xf32> -> vector<64x128xf32>
    %115 = arith.addf %3, %114 : vector<64x128xf32>
    %c0_94 = arith.constant 0 : index
    %c0_95 = arith.constant 0 : index
    %116 = vector.load %arg6[%c0_94, %c0_95] : memref<64x128xf32, #tpu.memory_space<vmem>>, vector<64x128xf32>
    tpu.vector_store %arg6[%c0_94, %c0_95], %115 {strides = array<i32>} : memref<64x128xf32, #tpu.memory_space<vmem>>, vector<64x128xf32>,
    %c1_i32_96 = arith.constant 1 : i32
    %117 = arith.cmpi eq, %arg1, %c1_i32_96 : i32
    %118 = arith.extui %117 : i1 to i32
    %c0_i32_97 = arith.constant 0 : i32
    %119 = arith.cmpi ne, %118, %c0_i32_97 : i32
    scf.if %119 {
      %cst_98 = arith.constant 0.000000e+00 : f32
      %120 = vector.broadcast %cst_98 : f32 to vector<64x128xf32>
      %121 = arith.maximumf %115, %120 : vector<64x128xf32>
      %c0_99 = arith.constant 0 : index
      %c0_100 = arith.constant 0 : index
      %c0_101 = arith.constant 0 : index
      %122 = vector.load %arg5[%c0_99, %c0_100, %c0_101] : memref<1x64x128xf32, #tpu.memory_space<vmem>>, vector<1x64x128xf32>
      %123 = vector.shape_cast %122 : vector<1x64x128xf32> to vector<64x128xf32>
      %124 = vector.shape_cast %121 : vector<64x128xf32> to vector<1x64x128xf32>
      tpu.vector_store %arg5[%c0_99, %c0_100, %c0_101], %124 {strides = array<i32>} : memref<1x64x128xf32, #tpu.memory_space<vmem>>, vector<1x64x128xf32>,
    } else {
    }
    return
  }
  func.func @transform_0(%arg0: i32, %arg1: i32) -> (i32, i32, i32, i32) {
    %c0_i32 = arith.constant 0 : i32
    %c0_i32_0 = arith.constant 0 : i32
    %c0_i32_1 = arith.constant 0 : i32
    %c0_i32_2 = arith.constant 0 : i32
    return %arg0, %c0_i32, %c0_i32_0, %c0_i32_1 : i32, i32, i32, i32
  }
  func.func @transform_1(%arg0: i32, %arg1: i32) -> (i32, i32, i32) {
    %c0_i32 = arith.constant 0 : i32
    %c0_i32_0 = arith.constant 0 : i32
    %c0_i32_1 = arith.constant 0 : i32
    %c0_i32_2 = arith.constant 0 : i32
    return %c0_i32, %c0_i32_0, %c0_i32_1 : i32, i32, i32
  }
  func.func @transform_2(%arg0: i32, %arg1: i32) -> (i32, i32, i32) {
    %c0_i32 = arith.constant 0 : i32
    %c0_i32_0 = arith.constant 0 : i32
    %c0_i32_1 = arith.constant 0 : i32
    %c0_i32_2 = arith.constant 0 : i32
    return %c0_i32, %c0_i32_0, %c0_i32_1 : i32, i32, i32
  }
  func.func @transform_3(%arg0: i32, %arg1: i32) -> (i32, i32, i32) {
    %c0_i32 = arith.constant 0 : i32
    %c0_i32_0 = arith.constant 0 : i32
    %c0_i32_1 = arith.constant 0 : i32
    return %arg0, %c0_i32, %c0_i32_0 : i32, i32, i32
  }
}

</mosaic_0001>

<llo_original>
// kernel: tpu_custom_call.1
$region0: #{tpu_custom_call.1}
  #allocation0 [shape = 'u32[]', space=smem, size = 0x4, offset = 0x4, fixed_abs, tag = 'smem constant byte address 0x4 - core index']
  #allocation1 [shape = 'u32[144,128]{1,0:T(1,128)}', space=vmem, size = 0x12000, scoped, tag = 'internal scratch']
  #allocation2 [shape = 'f32[64,128]{1,0:T(8,128)}', space=vmem, size = 0x8000, scoped, tag = 'scratch operand']
  #allocation3 [shape = 'f32[1,10,10,128]{3,2,1,0:T(8,128)}', space=vmem, size = 0x14000, scoped, tag = 'scratch operand']
  %s0 = inlined_call_operand.hbm [shape: f32[2,8,8,128], index: 0, kind: input, shape index: {}]
  %s1 = inlined_call_operand.hbm [shape: bf16[18,128,128], index: 1, kind: input, shape index: {}]
  %s2 = inlined_call_operand.hbm [shape: bf16[2,128,128], index: 2, kind: input, shape index: {}]
  %s3 = inlined_call_operand.hbm [shape: f32[2,64,128], index: 3, kind: output, shape index: {}]
  %s4 = sld [smem:[#allocation0]]
  $region65: #{tpu_custom_call.1} parent=0
    _
  %s6 = ssub.s32 1, %s4
  %s7 = scalar_select 0, %s6, %s4
  $region1: #{tpu_custom_call.1} parent=0
    #allocation4 [shape = 'u8[65536]{0}', space=vmem, size = 0x10000, scoped, tag = 'input window, operand 0']
    #allocation5 [shape = 's32[2]{0}', space=sflag, size = 0x8, scoped, tag = 'scoped memory for tpu_custom_call.1']
    #allocation6 [shape = 's32[2]{0}', space=sflag, size = 0x8, scoped, tag = 'scoped memory for tpu_custom_call.1']
    #allocation7 [shape = 'u8[589824]{0}', space=vmem, size = 0x90000, scoped, tag = 'input window, operand 1, single buffered']
    #allocation8 [shape = 's32[1]{0}', space=sflag, size = 0x4, scoped, tag = 'scoped memory for tpu_custom_call.1']
    #allocation9 [shape = 'u8[65536]{0}', space=vmem, size = 0x10000, scoped, tag = 'input window, operand 2, single buffered']
    #allocation10 [shape = 'u8[65536]{0}', space=vmem, size = 0x10000, scoped, tag = 'output window, operand 0']
    %8 = vsyncpa [#allocation5], 0
    %s9 = scalar_lea.sflag [#allocation5], 1
    %10 = vsyncpa %s9, 0
    %11 = vsyncpa [#allocation8], 0
    %12 = vsyncpa [#allocation6], 0
    %s13 = scalar_lea.sflag [#allocation6], 1
    %14 = vsyncpa %s13, 0
    loop: start=0, step=1, limit=6
    $region2: #{tpu_custom_call.1} parent=1 // loop_pre_header
      _
    $region3: #{tpu_custom_call.1} parent=1 // loop_header
      %s16 = sphi 0, %s20
      %p17 = scmp.ge.s32.totalorder %s16, 6
      %s23 = sphi 0, %s35
      %s24 = sphi 0, %s31
      %s25 = sphi 0, %s23
      %s26 = sphi 0, %s24
      %s27 = sphi 0, %s25
      %s28 = sphi 0, %s26
      %s38 = sphi 0, %s40
      %s41 = sphi 0, %s38
      %s42 = sphi 0, %s41
      %s58 = sphi 0, %s42
      %s62 = sphi 0, %s62
      %s64 = sphi 0, %s62
      %s65 = sphi 0, %s64
      %s79 = sphi 0, %s65
      %s83 = sphi 0, %s83
      %s85 = sphi 0, %s83
      %s86 = sphi 0, %s85
      %s100 = sphi 0, %s86
      %s106 = sphi 0, %s108
      %s109 = sphi 0, %s106
      %s110 = sphi 0, %s109
      %s126 = sphi 0, %s110
    $region4: #{tpu_custom_call.1} parent=1 // loop_header_branch
      %19 = sbr.rel (%p17) target = $region8
    $region5: #{tpu_custom_call.1} parent=1 // loop_body
      %s21 = ssub.s32 %s16, 1
      %s22 = ssub.s32 %s16, 2
      %s29 = sadd.s32 1, %s24
      %p30 = scmp.ge.s32.totalorder %s29, 2
      %s31 = scalar_select %p30, 0, %s29
      %s32 = sadd.s32 1, %s23
      %s33 = scalar_select %p30, %s32, %s23
      %p34 = scmp.ge.s32.totalorder %s33, 2
      %s35 = scalar_select %p34, 0, %s33
      %s36 = ssub.s32 %s23, %s35
      %p37 = scmp.eq.s32.totalorder %s36, 0
      %s39 = sadd.s32 %s38, 1
      %s40 = scalar_select %p37, %s38, %s39
      %p43 = pneg %p37
      %p44 = scmp.eq.s32.totalorder %s16, 3
      %p45 = por %p43, %p44
      %p46 = scmp.ne.s32.totalorder %s38, %s41
      %p47 = scmp.eq.s32.totalorder %s16, 0
      %p48 = por %p46, %p47
      %p49 = scmp.ne.s32.totalorder %s38, %s41
      %p50 = scmp.eq.s32.totalorder %s21, 3
      %p51 = por %p49, %p50
      %p52 = scmp.ne.s32.totalorder %s41, %s42
      %p53 = scmp.eq.s32.totalorder %s21, 0
      %p54 = por %p52, %p53
      %p55 = scmp.ne.s32.totalorder %s41, %s42
      %p56 = scmp.eq.s32.totalorder %s22, 3
      %p57 = por %p55, %p56
      %p59 = scmp.ne.s32.totalorder %s42, %s58
      %p60 = scmp.eq.s32.totalorder %s22, 0
      %p61 = por %p59, %p60
      %s63 = sadd.s32 %s62, 1
      %p66 = scmp.eq.s32.totalorder %s16, 3
      %p67 = scmp.ne.s32.totalorder %s62, %s64
      %p68 = scmp.eq.s32.totalorder %s16, 0
      %p69 = por %p67, %p68
      %p70 = scmp.ne.s32.totalorder %s62, %s64
      %p71 = scmp.eq.s32.totalorder %s21, 3
      %p72 = por %p70, %p71
      %p73 = scmp.ne.s32.totalorder %s64, %s65
      %p74 = scmp.eq.s32.totalorder %s21, 0
      %p75 = por %p73, %p74
      %p76 = scmp.ne.s32.totalorder %s64, %s65
      %p77 = scmp.eq.s32.totalorder %s22, 3
      %p78 = por %p76, %p77
      %p80 = scmp.ne.s32.totalorder %s65, %s79
      %p81 = scmp.eq.s32.totalorder %s22, 0
      %p82 = por %p80, %p81
      %s84 = sadd.s32 %s83, 1
      %p87 = scmp.eq.s32.totalorder %s16, 3
      %p88 = scmp.ne.s32.totalorder %s83, %s85
      %p89 = scmp.eq.s32.totalorder %s16, 0
      %p90 = por %p88, %p89
      %p91 = scmp.ne.s32.totalorder %s83, %s85
      %p92 = scmp.eq.s32.totalorder %s21, 3
      %p93 = por %p91, %p92
      %p94 = scmp.ne.s32.totalorder %s85, %s86
      %p95 = scmp.eq.s32.totalorder %s21, 0
      %p96 = por %p94, %p95
      %p97 = scmp.ne.s32.totalorder %s85, %s86
      %p98 = scmp.eq.s32.totalorder %s22, 3
      %p99 = por %p97, %p98
      %p101 = scmp.ne.s32.totalorder %s86, %s100
      %p102 = scmp.eq.s32.totalorder %s22, 0
      %p103 = por %p101, %p102
      %s104 = ssub.s32 %s23, %s35
      %p105 = scmp.eq.s32.totalorder %s104, 0
      %s107 = sadd.s32 %s106, 1
      %s108 = scalar_select %p105, %s106, %s107
      %p111 = pneg %p105
      %p112 = scmp.eq.s32.totalorder %s16, 3
      %p113 = por %p111, %p112
      %p114 = scmp.ne.s32.totalorder %s106, %s109
      %p115 = scmp.eq.s32.totalorder %s16, 0
      %p116 = por %p114, %p115
      %p117 = scmp.ne.s32.totalorder %s106, %s109
      %p118 = scmp.eq.s32.totalorder %s21, 3
      %p119 = por %p117, %p118
      %p120 = scmp.ne.s32.totalorder %s109, %s110
      %p121 = scmp.eq.s32.totalorder %s21, 0
      %p122 = por %p120, %p121
      %p123 = scmp.ne.s32.totalorder %s109, %s110
      %p124 = scmp.eq.s32.totalorder %s22, 3
      %p125 = por %p123, %p124
      %p127 = scmp.ne.s32.totalorder %s110, %s126
      %p128 = scmp.eq.s32.totalorder %s22, 0
      %p129 = por %p127, %p128
      %p130 = scmp.le.s32.totalorder 1, %s16
      %p131 = scmp.lt.s32.totalorder %s16, 5
      %p132 = pnand %p130, %p131
      %p133 = pneg %p132
      // Predicated region
      $region9: #{tpu_custom_call.1} parent=5 // pred_check
        _
      $region10: #{tpu_custom_call.1} parent=5 // pred_check_branch
        %135 = sbr.rel (%p132) target = $region12
      $region11: #{tpu_custom_call.1} parent=5 // pred_region
        %s136 = ssub.s32 %s16, 1
        // Predicated region
        $region13: #{tpu_custom_call.1} parent=11 // pred_check
          %p137 = pneg %p75
        $region14: #{tpu_custom_call.1} parent=11 // pred_check_branch
          %139 = sbr.rel (%p137) target = $region16
        $region15: #{tpu_custom_call.1} parent=11 // pred_region
          %s141 = ssub.s32 18432, 18432
          %142 = vsyncadd [#allocation8], %s141
          %s143 = sshll.u32 [#allocation7], 4
          %s144 = int_to_ptr.vmem [resolvable:$true] %s143
          %149 = dma.hbm_to_vmem [thread:$0]  %s1, 18432, %s144, [#allocation8], 64, 64, 4
        $region16: #{tpu_custom_call.1} parent=11 // pred_fallthru
          _
        // Predicated region
        $region17: #{tpu_custom_call.1} parent=11 // pred_check
          %p150 = pneg %p96
        $region18: #{tpu_custom_call.1} parent=11 // pred_check_branch
          %152 = sbr.rel (%p150) target = $region20
        $region19: #{tpu_custom_call.1} parent=11 // pred_region
          %s154 = ssub.s32 2048, 2048
          %155 = vsyncadd [#allocation8], %s154
          %s156 = sshll.u32 [#allocation9], 4
          %s157 = int_to_ptr.vmem [resolvable:$true] %s156
          %162 = dma.hbm_to_vmem [thread:$0]  %s2, 2048, %s157, [#allocation8], 64, 64, 4
        $region20: #{tpu_custom_call.1} parent=11 // pred_fallthru
          _
      $region12: #{tpu_custom_call.1} parent=5 // pred_fallthru
        _
      %p163 = scmp.lt.s32.totalorder %s16, 4
      // Predicated region
      $region21: #{tpu_custom_call.1} parent=5 // pred_check
        %p164 = pneg %p163
      $region22: #{tpu_custom_call.1} parent=5 // pred_check_branch
        %166 = sbr.rel (%p164) target = $region24
      $region23: #{tpu_custom_call.1} parent=5 // pred_region
        // Predicated region
        $region25: #{tpu_custom_call.1} parent=23 // pred_check
          %p167 = pneg %p48
        $region26: #{tpu_custom_call.1} parent=23 // pred_check_branch
          %169 = sbr.rel (%p167) target = $region28
        $region27: #{tpu_custom_call.1} parent=23 // pred_region
          %s170 = sand.u32 %s38, 1
          %s171 = scalar_lea.sflag [#allocation5], %s170
          %s172 = sand.u32 %s38, 1
          %s173 = smul.addr %s172, 64
          %s174 = scalar_lea.vmem [#allocation4], %s173
          %s176 = ssub.s32 1024, 1024
          %177 = vsyncadd %s171, %s176
          %s178 = smul.addr %s23, 8
          %s179 = smul.addr %s178, 128
          %s180 = scalar_lea.hbm %s0, %s179
          %s181 = sshll.u32 %s174, 4
          %s182 = int_to_ptr.vmem [resolvable:$true] %s181
          %187 = dma.hbm_to_vmem [thread:$0]  %s180, 1024, %s182, %s171, 128, 128, 8
        $region28: #{tpu_custom_call.1} parent=23 // pred_fallthru
          _
      $region24: #{tpu_custom_call.1} parent=5 // pred_fallthru
        _
      %p188 = scmp.le.s32.totalorder 1, %s16
      %p189 = scmp.lt.s32.totalorder %s16, 5
      %p190 = pnand %p188, %p189
      %p191 = pneg %p190
      // Predicated region
      $region29: #{tpu_custom_call.1} parent=5 // pred_check
        _
      $region30: #{tpu_custom_call.1} parent=5 // pred_check_branch
        %193 = sbr.rel (%p190) target = $region32
      $region31: #{tpu_custom_call.1} parent=5 // pred_region
        %s194 = ssub.s32 %s16, 1
        %s195 = sand.u32 %s41, 1
        %s196 = scalar_lea.sflag [#allocation5], %s195
        %s197 = sand.u32 %s41, 1
        %s198 = smul.addr %s197, 64
        %s199 = scalar_lea.vmem [#allocation4], %s198
        // Predicated region
        $region33: #{tpu_custom_call.1} parent=31 // pred_check
          %p200 = pneg %p54
        $region34: #{tpu_custom_call.1} parent=31 // pred_check_branch
          %202 = sbr.rel (%p200) target = $region36
        $region35: #{tpu_custom_call.1} parent=31 // pred_region
          %203 = dma.done %s196, 1024
        $region36: #{tpu_custom_call.1} parent=31 // pred_fallthru
          _
        // Predicated region
        $region37: #{tpu_custom_call.1} parent=31 // pred_check
          %p204 = pneg %p75
        $region38: #{tpu_custom_call.1} parent=31 // pred_check_branch
          %206 = sbr.rel (%p204) target = $region40
        $region39: #{tpu_custom_call.1} parent=31 // pred_region
          %207 = dma.done [#allocation8], 18432
        $region40: #{tpu_custom_call.1} parent=31 // pred_fallthru
          _
        // Predicated region
        $region41: #{tpu_custom_call.1} parent=31 // pred_check
          %p208 = pneg %p96
        $region42: #{tpu_custom_call.1} parent=31 // pred_check_branch
          %210 = sbr.rel (%p208) target = $region44
        $region43: #{tpu_custom_call.1} parent=31 // pred_region
          %211 = dma.done [#allocation8], 2048
        $region44: #{tpu_custom_call.1} parent=31 // pred_fallthru
          _
        %s212 = sand.u32 %s41, 1
        %s213 = scalar_lea.sflag [#allocation5], %s212
        %s214 = sand.u32 %s41, 1
        %s215 = smul.addr %s214, 64
        %s216 = scalar_lea.vmem [#allocation4], %s215
        %p217 = pneg %p54
        %p218 = pneg %p51
        %p219 = pneg %p75
        %p220 = pneg %p72
        %p221 = pneg %p96
        %p222 = pneg %p93
        %p223 = pneg %p122
        %p224 = pneg %p119
        %s225 = sand.u32 %s109, 1
        %s226 = scalar_lea.sflag [#allocation6], %s225
        %s227 = sand.u32 %s109, 1
        %s228 = smul.addr %s227, 64
        %s229 = scalar_lea.vmem [#allocation10], %s228
        %p231 = scmp.eq.s32.totalorder %s26, 0
        // Predicated region
        $region45: #{tpu_custom_call.1} parent=31 // pred_check
          %p232 = pneg %p231
        $region46: #{tpu_custom_call.1} parent=31 // pred_check_branch
          %234 = sbr.rel (%p232) target = $region48
        $region47: #{tpu_custom_call.1} parent=31 // pred_region
          %v235 = vld [vmem:[%s199] sm:$0xff]
          %v236 = vld [vmem:[%s199 + $0x8] sm:$0xff]
          %v237 = vld [vmem:[%s199 + $0x10] sm:$0xff]
          %v238 = vld [vmem:[%s199 + $0x18] sm:$0xff]
          %v239 = vld [vmem:[%s199 + $0x20] sm:$0xff]
          %v240 = vld [vmem:[%s199 + $0x28] sm:$0xff]
          %v241 = vld [vmem:[%s199 + $0x30] sm:$0xff]
          %v242 = vld [vmem:[%s199 + $0x38] sm:$0xff]
          %243 = vst [vmem:[#allocation2] sm:$0xff] %v235
          %244 = vst [vmem:[#allocation2 + $0x8] sm:$0xff] %v236
          %245 = vst [vmem:[#allocation2 + $0x10] sm:$0xff] %v237
          %246 = vst [vmem:[#allocation2 + $0x18] sm:$0xff] %v238
          %247 = vst [vmem:[#allocation2 + $0x20] sm:$0xff] %v239
          %248 = vst [vmem:[#allocation2 + $0x28] sm:$0xff] %v240
          %249 = vst [vmem:[#allocation2 + $0x30] sm:$0xff] %v241
          %250 = vst [vmem:[#allocation2 + $0x38] sm:$0xff] %v242
          %251 = vst [vmem:[#allocation3] sm:$0xff] 0.0
          %252 = vst [vmem:[#allocation3 + $0x8] sm:$0x3] 0.0
          %253 = vst [vmem:[#allocation3 + $0x10] sm:$0xff] 0.0
          %254 = vst [vmem:[#allocation3 + $0x18] sm:$0x3] 0.0
          %255 = vst [vmem:[#allocation3 + $0x20] sm:$0xff] 0.0
          %256 = vst [vmem:[#allocation3 + $0x28] sm:$0x3] 0.0
          %257 = vst [vmem:[#allocation3 + $0x30] sm:$0xff] 0.0
          %258 = vst [vmem:[#allocation3 + $0x38] sm:$0x3] 0.0
          %259 = vst [vmem:[#allocation3 + $0x40] sm:$0xff] 0.0
          %260 = vst [vmem:[#allocation3 + $0x48] sm:$0x3] 0.0
          %261 = vst [vmem:[#allocation3 + $0x50] sm:$0xff] 0.0
          %262 = vst [vmem:[#allocation3 + $0x58] sm:$0x3] 0.0
          %263 = vst [vmem:[#allocation3 + $0x60] sm:$0xff] 0.0
          %264 = vst [vmem:[#allocation3 + $0x68] sm:$0x3] 0.0
          %265 = vst [vmem:[#allocation3 + $0x70] sm:$0xff] 0.0
          %266 = vst [vmem:[#allocation3 + $0x78] sm:$0x3] 0.0
          %267 = vst [vmem:[#allocation3 + $0x80] sm:$0xff] 0.0
          %268 = vst [vmem:[#allocation3 + $0x88] sm:$0x3] 0.0
          %269 = vst [vmem:[#allocation3 + $0x90] sm:$0xff] 0.0
          %270 = vst [vmem:[#allocation3 + $0x98] sm:$0x3] 0.0
        $region48: #{tpu_custom_call.1} parent=31 // pred_fallthru
          _
        %v271 = vld [vmem:[#allocation2] sm:$0xff]
        %v272 = vld [vmem:[#allocation2 + $0x8] sm:$0xff]
        %v273 = vld [vmem:[#allocation2 + $0x10] sm:$0xff]
        %v274 = vld [vmem:[#allocation2 + $0x18] sm:$0xff]
        %v275 = vld [vmem:[#allocation2 + $0x20] sm:$0xff]
        %v276 = vld [vmem:[#allocation2 + $0x28] sm:$0xff]
        %v277 = vld [vmem:[#allocation2 + $0x30] sm:$0xff]
        %v278 = vld [vmem:[#allocation2 + $0x38] sm:$0xff]
        %v279 = vmax.f32 %v271, 0.0
        %v280 = vmax.f32 %v272, 0.0
        %v281 = vmax.f32 %v273, 0.0
        %v282 = vmax.f32 %v274, 0.0
        %v283 = vmax.f32 %v275, 0.0
        %v284 = vmax.f32 %v276, 0.0
        %v285 = vmax.f32 %v277, 0.0
        %v286 = vmax.f32 %v278, 0.0
        %s287 = scalar_lea.vmem [#allocation3], 16
        %288 = vst [vmem:[%s287 + $0x1] sm:$0xff] %v279
        %289 = vst [vmem:[%s287 + $0x11] sm:$0xff] %v280
        %290 = vst [vmem:[%s287 + $0x21] sm:$0xff] %v281
        %291 = vst [vmem:[%s287 + $0x31] sm:$0xff] %v282
        %292 = vst [vmem:[%s287 + $0x41] sm:$0xff] %v283
        %293 = vst [vmem:[%s287 + $0x51] sm:$0xff] %v284
        %294 = vst [vmem:[%s287 + $0x61] sm:$0xff] %v285
        %295 = vst [vmem:[%s287 + $0x71] sm:$0xff] %v286
        %v296 = vld [vmem:[#allocation3] sm:$0xff]
        %v297 = vld [vmem:[#allocation3 + $0x10] sm:$0xff]
        %v298 = vld [vmem:[#allocation3 + $0x20] sm:$0xff]
        %v299 = vld [vmem:[#allocation3 + $0x30] sm:$0xff]
        %v300 = vld [vmem:[#allocation3 + $0x40] sm:$0xff]
        %v301 = vld [vmem:[#allocation3 + $0x50] sm:$0xff]
        %v302 = vld [vmem:[#allocation3 + $0x60] sm:$0xff]
        %v303 = vld [vmem:[#allocation3 + $0x70] sm:$0xff]
        %v304 = vpack.c.bf16 %v296, %v296
        %v305 = vpack.c.bf16 %v297, %v297
        %v306 = vpack.c.bf16 %v298, %v298
        %v307 = vpack.c.bf16 %v299, %v299
        %v308 = vpack.c.bf16 %v300, %v300
        %v309 = vpack.c.bf16 %v301, %v301
        %v310 = vpack.c.bf16 %v302, %v302
        %v311 = vpack.c.bf16 %v303, %v303
        %s312 = smul.u32 %s26, 9
        %s313 = smul.u32 %s312, 16
        %s314 = smul.addr %s313, 4
        %s315 = scalar_lea.vmem [#allocation7], %s314
        %v316 = vld [vmem:[%s315] sm:$0xf]
        %v317 = vld [vmem:[%s315 + $0x4] sm:$0xf]
        %v318 = vld [vmem:[%s315 + $0x8] sm:$0xf]
        %v319 = vld [vmem:[%s315 + $0xc] sm:$0xf]
        %v320 = vld [vmem:[%s315 + $0x10] sm:$0xf]
        %v321 = vld [vmem:[%s315 + $0x14] sm:$0xf]
        %v322 = vld [vmem:[%s315 + $0x18] sm:$0xf]
        %v323 = vld [vmem:[%s315 + $0x1c] sm:$0xf]
        %v324 = vld [vmem:[%s315 + $0x20] sm:$0xf]
        %v325 = vld [vmem:[%s315 + $0x24] sm:$0xf]
        %v326 = vld [vmem:[%s315 + $0x28] sm:$0xf]
        %v327 = vld [vmem:[%s315 + $0x2c] sm:$0xf]
        %v328 = vld [vmem:[%s315 + $0x30] sm:$0xf]
        %v329 = vld [vmem:[%s315 + $0x34] sm:$0xf]
        %v330 = vld [vmem:[%s315 + $0x38] sm:$0xf]
        %v331 = vld [vmem:[%s315 + $0x3c] sm:$0xf]
        %v332 = vld [vmem:[#allocation3 + $0x1] sm:$0xff]
        %v333 = vld [vmem:[#allocation3 + $0x11] sm:$0xff]
        %v334 = vld [vmem:[#allocation3 + $0x21] sm:$0xff]
        %v335 = vld [vmem:[#allocation3 + $0x31] sm:$0xff]
        %v336 = vld [vmem:[#allocation3 + $0x41] sm:$0xff]
        %v337 = vld [vmem:[#allocation3 + $0x51] sm:$0xff]
        %v338 = vld [vmem:[#allocation3 + $0x61] sm:$0xff]
        %v339 = vld [vmem:[#allocation3 + $0x71] sm:$0xff]
        %v340 = vpack.c.bf16 %v332, %v332
        %v341 = vpack.c.bf16 %v333, %v333
        %v342 = vpack.c.bf16 %v334, %v334
        %v343 = vpack.c.bf16 %v335, %v335
        %v344 = vpack.c.bf16 %v336, %v336
        %v345 = vpack.c.bf16 %v337, %v337
        %v346 = vpack.c.bf16 %v338, %v338
        %v347 = vpack.c.bf16 %v339, %v339
        %s348 = sadd.s32 %s312, 1
        %s349 = smul.u32 %s348, 16
        %s350 = smul.addr %s349, 4
        %s351 = scalar_lea.vmem [#allocation7], %s350
        %v352 = vld [vmem:[%s351] sm:$0xf]
        %v353 = vld [vmem:[%s351 + $0x4] sm:$0xf]
        %v354 = vld [vmem:[%s351 + $0x8] sm:$0xf]
        %v355 = vld [vmem:[%s351 + $0xc] sm:$0xf]
        %v356 = vld [vmem:[%s351 + $0x10] sm:$0xf]
        %v357 = vld [vmem:[%s351 + $0x14] sm:$0xf]
        %v358 = vld [vmem:[%s351 + $0x18] sm:$0xf]
        %v359 = vld [vmem:[%s351 + $0x1c] sm:$0xf]
        %v360 = vld [vmem:[%s351 + $0x20] sm:$0xf]
        %v361 = vld [vmem:[%s351 + $0x24] sm:$0xf]
        %v362 = vld [vmem:[%s351 + $0x28] sm:$0xf]
        %v363 = vld [vmem:[%s351 + $0x2c] sm:$0xf]
        %v364 = vld [vmem:[%s351 + $0x30] sm:$0xf]
        %v365 = vld [vmem:[%s351 + $0x34] sm:$0xf]
        %v366 = vld [vmem:[%s351 + $0x38] sm:$0xf]
        %v367 = vld [vmem:[%s351 + $0x3c] sm:$0xf]
        %v376 = vunpack.c.l.b16 %v340
        %v377 = vunpack.c.l.b16 %v341
        %v378 = vunpack.c.l.b16 %v342
        %v379 = vunpack.c.l.b16 %v343
        %v380 = vunpack.c.l.b16 %v344
        %v381 = vunpack.c.l.b16 %v345
        %v382 = vunpack.c.l.b16 %v346
        %v383 = vunpack.c.l.b16 %v347
        %v384 = vpack.c.b16 %v377, %v376
        %v385 = vpack.c.b16 %v379, %v378
        %v386 = vpack.c.b16 %v381, %v380
        %v387 = vpack.c.b16 %v383, %v382
        %v408 = vunpack.c.l.b16 %v352
        %v409 = vunpack.c.l.b16 %v353
        %v410 = vunpack.c.l.b16 %v354
        %v411 = vunpack.c.l.b16 %v355
        %v412 = vunpack.c.l.b16 %v356
        %v413 = vunpack.c.l.b16 %v357
        %v414 = vunpack.c.l.b16 %v358
        %v415 = vunpack.c.l.b16 %v359
        %v416 = vunpack.c.l.b16 %v360
        %v417 = vunpack.c.l.b16 %v361
        %v418 = vunpack.c.l.b16 %v362
        %v419 = vunpack.c.l.b16 %v363
        %v420 = vunpack.c.l.b16 %v364
        %v421 = vunpack.c.l.b16 %v365
        %v422 = vunpack.c.l.b16 %v366
        %v423 = vunpack.c.l.b16 %v367
        %v424 = vpack.c.b16 %v409, %v408
        %v425 = vpack.c.b16 %v411, %v410
        %v426 = vpack.c.b16 %v413, %v412
        %v427 = vpack.c.b16 %v415, %v414
        %v428 = vpack.c.b16 %v417, %v416
        %v429 = vpack.c.b16 %v419, %v418
        %v430 = vpack.c.b16 %v421, %v420
        %v431 = vpack.c.b16 %v423, %v422
        %440 = vmatprep.subr.bf16.mxu0 0
        %441 = vmatpush1.bf16.msra.mxu0 %v424
        %442 = vmatprep.subr.bf16.mxu0 0
        %443 = vmatpush1.bf16.msra.mxu0 %v425
        %444 = vmatprep.subr.bf16.mxu0 0
        %445 = vmatpush1.bf16.msra.mxu0 %v426
        %446 = vmatprep.subr.bf16.mxu0 0
        %447 = vmatpush1.bf16.msra.mxu0 %v427
        %448 = vmatprep.subr.bf16.mxu0 0
        %449 = vmatpush1.bf16.msra.mxu0 %v428
        %450 = vmatprep.subr.bf16.mxu0 0
        %451 = vmatpush1.bf16.msra.mxu0 %v429
        %452 = vmatprep.subr.bf16.mxu0 0
        %453 = vmatpush1.bf16.msra.mxu0 %v430
        %454 = vmatprep.subr.bf16.mxu0 0
        %455 = vmatpush1.bf16.msra.mxu0 %v431
        %456 = vmatprep.subr.bf16.mxu0 0
        %457 = vmatpush1.bf16.msra.mxu0 0
        %458 = vmatprep.subr.bf16.mxu0 0
        %459 = vmatpush1.bf16.msra.mxu0 0
        %460 = vmatprep.subr.bf16.mxu0 0
        %461 = vmatpush1.bf16.msra.mxu0 0
        %462 = vmatprep.subr.bf16.mxu0 0
        %463 = vmatpush1.bf16.msra.mxu0 0
        %464 = vmatprep.subr.bf16.mxu0 0
        %465 = vmatpush1.bf16.msra.mxu0 0
        %466 = vmatprep.subr.bf16.mxu0 0
        %467 = vmatpush1.bf16.msra.mxu0 0
        %468 = vmatprep.subr.bf16.mxu0 0
        %469 = vmatpush1.bf16.msra.mxu0 0
        %470 = vmatprep.subr.bf16.mxu0 0
        %471 = vmatpush1.bf16.msra.mxu0 0
        %472 = vmatprep.mubr.bf16.mxu0 0
        %473 = vmatmul.mubr.bf16.gmra.mrb[0].mxu0 %v384
        %v474 = vpop.f32.mrb[0].mxu0
        %v475 = vadd.f32 0.0, %v474
        %v476 = vpop.f32.mrb[0].mxu0
        %v477 = vpop.f32.mrb[0].mxu0
        %v478 = vadd.f32 0.0, %v477
        %v479 = vpop.f32.mrb[0].mxu0
        %480 = vmatprep.mubr.bf16.mxu0 0
        %481 = vmatmul.mubr.bf16.gmra.mrb[0].mxu0 %v385
        %v482 = vpop.f32.mrb[0].mxu0
        %v483 = vadd.f32 0.0, %v482
        %v484 = vpop.f32.mrb[0].mxu0
        %v485 = vpop.f32.mrb[0].mxu0
        %v486 = vadd.f32 0.0, %v485
        %v487 = vpop.f32.mrb[0].mxu0
        %488 = vmatprep.mubr.bf16.mxu0 0
        %489 = vmatmul.mubr.bf16.gmra.mrb[0].mxu0 %v386
        %v490 = vpop.f32.mrb[0].mxu0
        %v491 = vadd.f32 0.0, %v490
        %v492 = vpop.f32.mrb[0].mxu0
        %v493 = vpop.f32.mrb[0].mxu0
        %v494 = vadd.f32 0.0, %v493
        %v495 = vpop.f32.mrb[0].mxu0
        %496 = vmatprep.mubr.bf16.mxu0 0
        %497 = vmatmul.mubr.bf16.gmra.mrb[0].mxu0 %v387
        %v498 = vpop.f32.mrb[0].mxu0
        %v499 = vadd.f32 0.0, %v498
        %v500 = vpop.f32.mrb[0].mxu0
        %v501 = vpop.f32.mrb[0].mxu0
        %v502 = vadd.f32 0.0, %v501
        %v503 = vpop.f32.mrb[0].mxu0
        %504 = vdwg.mxu0
        %v513 = vunpack.c.l.b16 %v304
        %v514 = vunpack.c.l.b16 %v305
        %v515 = vunpack.c.l.b16 %v306
        %v516 = vunpack.c.l.b16 %v307
        %v517 = vunpack.c.l.b16 %v308
        %v518 = vunpack.c.l.b16 %v309
        %v519 = vunpack.c.l.b16 %v310
        %v520 = vunpack.c.l.b16 %v311
        %v521 = vpack.c.b16 %v514, %v513
        %v522 = vpack.c.b16 %v516, %v515
        %v523 = vpack.c.b16 %v518, %v517
        %v524 = vpack.c.b16 %v520, %v519
        %v545 = vunpack.c.l.b16 %v316
        %v546 = vunpack.c.l.b16 %v317
        %v547 = vunpack.c.l.b16 %v318
        %v548 = vunpack.c.l.b16 %v319
        %v549 = vunpack.c.l.b16 %v320
        %v550 = vunpack.c.l.b16 %v321
        %v551 = vunpack.c.l.b16 %v322
        %v552 = vunpack.c.l.b16 %v323
        %v553 = vunpack.c.l.b16 %v324
        %v554 = vunpack.c.l.b16 %v325
        %v555 = vunpack.c.l.b16 %v326
        %v556 = vunpack.c.l.b16 %v327
        %v557 = vunpack.c.l.b16 %v328
        %v558 = vunpack.c.l.b16 %v329
        %v559 = vunpack.c.l.b16 %v330
        %v560 = vunpack.c.l.b16 %v331
        %v561 = vpack.c.b16 %v546, %v545
        %v562 = vpack.c.b16 %v548, %v547
        %v563 = vpack.c.b16 %v550, %v549
        %v564 = vpack.c.b16 %v552, %v551
        %v565 = vpack.c.b16 %v554, %v553
        %v566 = vpack.c.b16 %v556, %v555
        %v567 = vpack.c.b16 %v558, %v557
        %v568 = vpack.c.b16 %v560, %v559
        %577 = vmatprep.subr.bf16.mxu0 0
        %578 = vmatpush1.bf16.msra.mxu0 %v561
        %579 = vmatprep.subr.bf16.mxu0 0
        %580 = vmatpush1.bf16.msra.mxu0 %v562
        %581 = vmatprep.subr.bf16.mxu0 0
        %582 = vmatpush1.bf16.msra.mxu0 %v563
        %583 = vmatprep.subr.bf16.mxu0 0
        %584 = vmatpush1.bf16.msra.mxu0 %v564
        %585 = vmatprep.subr.bf16.mxu0 0
        %586 = vmatpush1.bf16.msra.mxu0 %v565
        %587 = vmatprep.subr.bf16.mxu0 0
        %588 = vmatpush1.bf16.msra.mxu0 %v566
        %589 = vmatprep.subr.bf16.mxu0 0
        %590 = vmatpush1.bf16.msra.mxu0 %v567
        %591 = vmatprep.subr.bf16.mxu0 0
        %592 = vmatpush1.bf16.msra.mxu0 %v568
        %593 = vmatprep.subr.bf16.mxu0 0
        %594 = vmatpush1.bf16.msra.mxu0 0
        %595 = vmatprep.subr.bf16.mxu0 0
        %596 = vmatpush1.bf16.msra.mxu0 0
        %597 = vmatprep.subr.bf16.mxu0 0
        %598 = vmatpush1.bf16.msra.mxu0 0
        %599 = vmatprep.subr.bf16.mxu0 0
        %600 = vmatpush1.bf16.msra.mxu0 0
        %601 = vmatprep.subr.bf16.mxu0 0
        %602 = vmatpush1.bf16.msra.mxu0 0
        %603 = vmatprep.subr.bf16.mxu0 0
        %604 = vmatpush1.bf16.msra.mxu0 0
        %605 = vmatprep.subr.bf16.mxu0 0
        %606 = vmatpush1.bf16.msra.mxu0 0
        %607 = vmatprep.subr.bf16.mxu0 0
        %608 = vmatpush1.bf16.msra.mxu0 0
        %609 = vmatprep.mubr.bf16.mxu0 0
        %610 = vmatmul.mubr.bf16.gmra.mrb[0].mxu0 %v521
        %v611 = vpop.f32.mrb[0].mxu0
        %v612 = vadd.f32 %v475, %v611
        %v613 = vpop.f32.mrb[0].mxu0
        %v614 = vpop.f32.mrb[0].mxu0
        %v615 = vadd.f32 %v478, %v614
        %v616 = vpop.f32.mrb[0].mxu0
        %617 = vmatprep.mubr.bf16.mxu0 0
        %618 = vmatmul.mubr.bf16.gmra.mrb[0].mxu0 %v522
        %v619 = vpop.f32.mrb[0].mxu0
        %v620 = vadd.f32 %v483, %v619
        %v621 = vpop.f32.mrb[0].mxu0
        %v622 = vpop.f32.mrb[0].mxu0
        %v623 = vadd.f32 %v486, %v622
        %v624 = vpop.f32.mrb[0].mxu0
        %625 = vmatprep.mubr.bf16.mxu0 0
        %626 = vmatmul.mubr.bf16.gmra.mrb[0].mxu0 %v523
        %v627 = vpop.f32.mrb[0].mxu0
        %v628 = vadd.f32 %v491, %v627
        %v629 = vpop.f32.mrb[0].mxu0
        %v630 = vpop.f32.mrb[0].mxu0
        %v631 = vadd.f32 %v494, %v630
        %v632 = vpop.f32.mrb[0].mxu0
        %633 = vmatprep.mubr.bf16.mxu0 0
        %634 = vmatmul.mubr.bf16.gmra.mrb[0].mxu0 %v524
        %v635 = vpop.f32.mrb[0].mxu0
        %v636 = vadd.f32 %v499, %v635
        %v637 = vpop.f32.mrb[0].mxu0
        %v638 = vpop.f32.mrb[0].mxu0
        %v639 = vadd.f32 %v502, %v638
        %v640 = vpop.f32.mrb[0].mxu0
        %641 = vdwg.mxu0
        %v642 = vld [vmem:[#allocation3 + $0x2] sm:$0xff]
        %v643 = vld [vmem:[#allocation3 + $0x12] sm:$0xff]
        %v644 = vld [vmem:[#allocation3 + $0x22] sm:$0xff]
        %v645 = vld [vmem:[#allocation3 + $0x32] sm:$0xff]
        %v646 = vld [vmem:[#allocation3 + $0x42] sm:$0xff]
        %v647 = vld [vmem:[#allocation3 + $0x52] sm:$0xff]
        %v648 = vld [vmem:[#allocation3 + $0x62] sm:$0xff]
        %v649 = vld [vmem:[#allocation3 + $0x72] sm:$0xff]
        %v650 = vpack.c.bf16 %v642, %v642
        %v651 = vpack.c.bf16 %v643, %v643
        %v652 = vpack.c.bf16 %v644, %v644
        %v653 = vpack.c.bf16 %v645, %v645
        %v654 = vpack.c.bf16 %v646, %v646
        %v655 = vpack.c.bf16 %v647, %v647
        %v656 = vpack.c.bf16 %v648, %v648
        %v657 = vpack.c.bf16 %v649, %v649
        %s658 = sadd.s32 %s312, 2
        %s659 = smul.u32 %s658, 16
        %s660 = smul.addr %s659, 4
        %s661 = scalar_lea.vmem [#allocation7], %s660
        %v662 = vld [vmem:[%s661] sm:$0xf]
        %v663 = vld [vmem:[%s661 + $0x4] sm:$0xf]
        %v664 = vld [vmem:[%s661 + $0x8] sm:$0xf]
        %v665 = vld [vmem:[%s661 + $0xc] sm:$0xf]
        %v666 = vld [vmem:[%s661 + $0x10] sm:$0xf]
        %v667 = vld [vmem:[%s661 + $0x14] sm:$0xf]
        %v668 = vld [vmem:[%s661 + $0x18] sm:$0xf]
        %v669 = vld [vmem:[%s661 + $0x1c] sm:$0xf]
        %v670 = vld [vmem:[%s661 + $0x20] sm:$0xf]
        %v671 = vld [vmem:[%s661 + $0x24] sm:$0xf]
        %v672 = vld [vmem:[%s661 + $0x28] sm:$0xf]
        %v673 = vld [vmem:[%s661 + $0x2c] sm:$0xf]
        %v674 = vld [vmem:[%s661 + $0x30] sm:$0xf]
        %v675 = vld [vmem:[%s661 + $0x34] sm:$0xf]
        %v676 = vld [vmem:[%s661 + $0x38] sm:$0xf]
        %v677 = vld [vmem:[%s661 + $0x3c] sm:$0xf]
        %v686 = vunpack.c.l.b16 %v650
        %v687 = vunpack.c.l.b16 %v651
        %v688 = vunpack.c.l.b16 %v652
        %v689 = vunpack.c.l.b16 %v653
        %v690 = vunpack.c.l.b16 %v654
        %v691 = vunpack.c.l.b16 %v655
        %v692 = vunpack.c.l.b16 %v656
        %v693 = vunpack.c.l.b16 %v657
        %v694 = vpack.c.b16 %v687, %v686
        %v695 = vpack.c.b16 %v689, %v688
        %v696 = vpack.c.b16 %v691, %v690
        %v697 = vpack.c.b16 %v693, %v692
        %v718 = vunpack.c.l.b16 %v662
        %v719 = vunpack.c.l.b16 %v663
        %v720 = vunpack.c.l.b16 %v664
        %v721 = vunpack.c.l.b16 %v665
        %v722 = vunpack.c.l.b16 %v666
        %v723 = vunpack.c.l.b16 %v667
        %v724 = vunpack.c.l.b16 %v668
        %v725 = vunpack.c.l.b16 %v669
        %v726 = vunpack.c.l.b16 %v670
        %v727 = vunpack.c.l.b16 %v671
        %v728 = vunpack.c.l.b16 %v672
        %v729 = vunpack.c.l.b16 %v673
        %v730 = vunpack.c.l.b16 %v674
        %v731 = vunpack.c.l.b16 %v675
        %v732 = vunpack.c.l.b16 %v676
        %v733 = vunpack.c.l.b16 %v677
        %v734 = vpack.c.b16 %v719, %v718
        %v735 = vpack.c.b16 %v721, %v720
        %v736 = vpack.c.b16 %v723, %v722
        %v737 = vpack.c.b16 %v725, %v724
        %v738 = vpack.c.b16 %v727, %v726
        %v739 = vpack.c.b16 %v729, %v728
        %v740 = vpack.c.b16 %v731, %v730
        %v741 = vpack.c.b16 %v733, %v732
        %750 = vmatprep.subr.bf16.mxu0 0
        %751 = vmatpush1.bf16.msra.mxu0 %v734
        %752 = vmatprep.subr.bf16.mxu0 0
        %753 = vmatpush1.bf16.msra.mxu0 %v735
        %754 = vmatprep.subr.bf16.mxu0 0
        %755 = vmatpush1.bf16.msra.mxu0 %v736
        %756 = vmatprep.subr.bf16.mxu0 0
        %757 = vmatpush1.bf16.msra.mxu0 %v737
        %758 = vmatprep.subr.bf16.mxu0 0
        %759 = vmatpush1.bf16.msra.mxu0 %v738
        %760 = vmatprep.subr.bf16.mxu0 0
        %761 = vmatpush1.bf16.msra.mxu0 %v739
        %762 = vmatprep.subr.bf16.mxu0 0
        %763 = vmatpush1.bf16.msra.mxu0 %v740
        %764 = vmatprep.subr.bf16.mxu0 0
        %765 = vmatpush1.bf16.msra.mxu0 %v741
        %766 = vmatprep.subr.bf16.mxu0 0
        %767 = vmatpush1.bf16.msra.mxu0 0
        %768 = vmatprep.subr.bf16.mxu0 0
        %769 = vmatpush1.bf16.msra.mxu0 0
        %770 = vmatprep.subr.bf16.mxu0 0
        %771 = vmatpush1.bf16.msra.mxu0 0
        %772 = vmatprep.subr.bf16.mxu0 0
        %773 = vmatpush1.bf16.msra.mxu0 0
        %774 = vmatprep.subr.bf16.mxu0 0
        %775 = vmatpush1.bf16.msra.mxu0 0
        %776 = vmatprep.subr.bf16.mxu0 0
        %777 = vmatpush1.bf16.msra.mxu0 0
        %778 = vmatprep.subr.bf16.mxu0 0
        %779 = vmatpush1.bf16.msra.mxu0 0
        %780 = vmatprep.subr.bf16.mxu0 0
        %781 = vmatpush1.bf16.msra.mxu0 0
        %782 = vmatprep.mubr.bf16.mxu0 0
        %783 = vmatmul.mubr.bf16.gmra.mrb[0].mxu0 %v694
        %v784 = vpop.f32.mrb[0].mxu0
        %v785 = vadd.f32 0.0, %v784
        %v786 = vpop.f32.mrb[0].mxu0
        %v787 = vpop.f32.mrb[0].mxu0
        %v788 = vadd.f32 0.0, %v787
        %v789 = vpop.f32.mrb[0].mxu0
        %790 = vmatprep.mubr.bf16.mxu0 0
        %791 = vmatmul.mubr.bf16.gmra.mrb[0].mxu0 %v695
        %v792 = vpop.f32.mrb[0].mxu0
        %v793 = vadd.f32 0.0, %v792
        %v794 = vpop.f32.mrb[0].mxu0
        %v795 = vpop.f32.mrb[0].mxu0
        %v796 = vadd.f32 0.0, %v795
        %v797 = vpop.f32.mrb[0].mxu0
        %798 = vmatprep.mubr.bf16.mxu0 0
        %799 = vmatmul.mubr.bf16.gmra.mrb[0].mxu0 %v696
        %v800 = vpop.f32.mrb[0].mxu0
        %v801 = vadd.f32 0.0, %v800
        %v802 = vpop.f32.mrb[0].mxu0
        %v803 = vpop.f32.mrb[0].mxu0
        %v804 = vadd.f32 0.0, %v803
        %v805 = vpop.f32.mrb[0].mxu0
        %806 = vmatprep.mubr.bf16.mxu0 0
        %807 = vmatmul.mubr.bf16.gmra.mrb[0].mxu0 %v697
        %v808 = vpop.f32.mrb[0].mxu0
        %v809 = vadd.f32 0.0, %v808
        %v810 = vpop.f32.mrb[0].mxu0
        %v811 = vpop.f32.mrb[0].mxu0
        %v812 = vadd.f32 0.0, %v811
        %v813 = vpop.f32.mrb[0].mxu0
        %814 = vdwg.mxu0
        %v815 = vadd.f32 %v612, %v785
        %v816 = vadd.f32 %v615, %v788
        %v817 = vadd.f32 %v620, %v793
        %v818 = vadd.f32 %v623, %v796
        %v819 = vadd.f32 %v628, %v801
        %v820 = vadd.f32 %v631, %v804
        %v821 = vadd.f32 %v636, %v809
        %v822 = vadd.f32 %v639, %v812
        %v823 = vld [vmem:[%s287] sm:$0xff]
        %v824 = vld [vmem:[%s287 + $0x10] sm:$0xff]
        %v825 = vld [vmem:[%s287 + $0x20] sm:$0xff]
        %v826 = vld [vmem:[%s287 + $0x30] sm:$0xff]
        %v827 = vld [vmem:[%s287 + $0x40] sm:$0xff]
        %v828 = vld [vmem:[%s287 + $0x50] sm:$0xff]
        %v829 = vld [vmem:[%s287 + $0x60] sm:$0xff]
        %v830 = vld [vmem:[%s287 + $0x70] sm:$0xff]
        %v831 = vpack.c.bf16 %v823, %v823
        %v832 = vpack.c.bf16 %v824, %v824
        %v833 = vpack.c.bf16 %v825, %v825
        %v834 = vpack.c.bf16 %v826, %v826
        %v835 = vpack.c.bf16 %v827, %v827
        %v836 = vpack.c.bf16 %v828, %v828
        %v837 = vpack.c.bf16 %v829, %v829
        %v838 = vpack.c.bf16 %v830, %v830
        %s839 = sadd.s32 %s312, 3
        %s840 = smul.u32 %s839, 16
        %s841 = smul.addr %s840, 4
        %s842 = scalar_lea.vmem [#allocation7], %s841
        %v843 = vld [vmem:[%s842] sm:$0xf]
        %v844 = vld [vmem:[%s842 + $0x4] sm:$0xf]
        %v845 = vld [vmem:[%s842 + $0x8] sm:$0xf]
        %v846 = vld [vmem:[%s842 + $0xc] sm:$0xf]
        %v847 = vld [vmem:[%s842 + $0x10] sm:$0xf]
        %v848 = vld [vmem:[%s842 + $0x14] sm:$0xf]
        %v849 = vld [vmem:[%s842 + $0x18] sm:$0xf]
        %v850 = vld [vmem:[%s842 + $0x1c] sm:$0xf]
        %v851 = vld [vmem:[%s842 + $0x20] sm:$0xf]
        %v852 = vld [vmem:[%s842 + $0x24] sm:$0xf]
        %v853 = vld [vmem:[%s842 + $0x28] sm:$0xf]
        %v854 = vld [vmem:[%s842 + $0x2c] sm:$0xf]
        %v855 = vld [vmem:[%s842 + $0x30] sm:$0xf]
        %v856 = vld [vmem:[%s842 + $0x34] sm:$0xf]
        %v857 = vld [vmem:[%s842 + $0x38] sm:$0xf]
        %v858 = vld [vmem:[%s842 + $0x3c] sm:$0xf]
        %v867 = vunpack.c.l.b16 %v831
        %v868 = vunpack.c.l.b16 %v832
        %v869 = vunpack.c.l.b16 %v833
        %v870 = vunpack.c.l.b16 %v834
        %v871 = vunpack.c.l.b16 %v835
        %v872 = vunpack.c.l.b16 %v836
        %v873 = vunpack.c.l.b16 %v837
        %v874 = vunpack.c.l.b16 %v838
        %v875 = vpack.c.b16 %v868, %v867
        %v876 = vpack.c.b16 %v870, %v869
        %v877 = vpack.c.b16 %v872, %v871
        %v878 = vpack.c.b16 %v874, %v873
        %v899 = vunpack.c.l.b16 %v843
        %v900 = vunpack.c.l.b16 %v844
        %v901 = vunpack.c.l.b16 %v845
        %v902 = vunpack.c.l.b16 %v846
        %v903 = vunpack.c.l.b16 %v847
        %v904 = vunpack.c.l.b16 %v848
        %v905 = vunpack.c.l.b16 %v849
        %v906 = vunpack.c.l.b16 %v850
        %v907 = vunpack.c.l.b16 %v851
        %v908 = vunpack.c.l.b16 %v852
        %v909 = vunpack.c.l.b16 %v853
        %v910 = vunpack.c.l.b16 %v854
        %v911 = vunpack.c.l.b16 %v855
        %v912 = vunpack.c.l.b16 %v856
        %v913 = vunpack.c.l.b16 %v857
        %v914 = vunpack.c.l.b16 %v858
        %v915 = vpack.c.b16 %v900, %v899
        %v916 = vpack.c.b16 %v902, %v901
        %v917 = vpack.c.b16 %v904, %v903
        %v918 = vpack.c.b16 %v906, %v905
        %v919 = vpack.c.b16 %v908, %v907
        %v920 = vpack.c.b16 %v910, %v909
        %v921 = vpack.c.b16 %v912, %v911
        %v922 = vpack.c.b16 %v914, %v913
        %931 = vmatprep.subr.bf16.mxu0 0
        %932 = vmatpush1.bf16.msra.mxu0 %v915
        %933 = vmatprep.subr.bf16.mxu0 0
        %934 = vmatpush1.bf16.msra.mxu0 %v916
        %935 = vmatprep.subr.bf16.mxu0 0
        %936 = vmatpush1.bf16.msra.mxu0 %v917
        %937 = vmatprep.subr.bf16.mxu0 0
        %938 = vmatpush1.bf16.msra.mxu0 %v918
        %939 = vmatprep.subr.bf16.mxu0 0
        %940 = vmatpush1.bf16.msra.mxu0 %v919
        %941 = vmatprep.subr.bf16.mxu0 0
        %942 = vmatpush1.bf16.msra.mxu0 %v920
        %943 = vmatprep.subr.bf16.mxu0 0
        %944 = vmatpush1.bf16.msra.mxu0 %v921
        %945 = vmatprep.subr.bf16.mxu0 0
        %946 = vmatpush1.bf16.msra.mxu0 %v922
        %947 = vmatprep.subr.bf16.mxu0 0
        %948 = vmatpush1.bf16.msra.mxu0 0
        %949 = vmatprep.subr.bf16.mxu0 0
        %950 = vmatpush1.bf16.msra.mxu0 0
        %951 = vmatprep.subr.bf16.mxu0 0
        %952 = vmatpush1.bf16.msra.mxu0 0
        %953 = vmatprep.subr.bf16.mxu0 0
        %954 = vmatpush1.bf16.msra.mxu0 0
        %955 = vmatprep.subr.bf16.mxu0 0
        %956 = vmatpush1.bf16.msra.mxu0 0
        %957 = vmatprep.subr.bf16.mxu0 0
        %958 = vmatpush1.bf16.msra.mxu0 0
        %959 = vmatprep.subr.bf16.mxu0 0
        %960 = vmatpush1.bf16.msra.mxu0 0
        %961 = vmatprep.subr.bf16.mxu0 0
        %962 = vmatpush1.bf16.msra.mxu0 0
        %963 = vmatprep.mubr.bf16.mxu0 0
        %964 = vmatmul.mubr.bf16.gmra.mrb[0].mxu0 %v875
        %v965 = vpop.f32.mrb[0].mxu0
        %v966 = vadd.f32 0.0, %v965
        %v967 = vpop.f32.mrb[0].mxu0
        %v968 = vpop.f32.mrb[0].mxu0
        %v969 = vadd.f32 0.0, %v968
        %v970 = vpop.f32.mrb[0].mxu0
        %971 = vmatprep.mubr.bf16.mxu0 0
        %972 = vmatmul.mubr.bf16.gmra.mrb[0].mxu0 %v876
        %v973 = vpop.f32.mrb[0].mxu0
        %v974 = vadd.f32 0.0, %v973
        %v975 = vpop.f32.mrb[0].mxu0
        %v976 = vpop.f32.mrb[0].mxu0
        %v977 = vadd.f32 0.0, %v976
        %v978 = vpop.f32.mrb[0].mxu0
        %979 = vmatprep.mubr.bf16.mxu0 0
        %980 = vmatmul.mubr.bf16.gmra.mrb[0].mxu0 %v877
        %v981 = vpop.f32.mrb[0].mxu0
        %v982 = vadd.f32 0.0, %v981
        %v983 = vpop.f32.mrb[0].mxu0
        %v984 = vpop.f32.mrb[0].mxu0
        %v985 = vadd.f32 0.0, %v984
        %v986 = vpop.f32.mrb[0].mxu0
        %987 = vmatprep.mubr.bf16.mxu0 0
        %988 = vmatmul.mubr.bf16.gmra.mrb[0].mxu0 %v878
        %v989 = vpop.f32.mrb[0].mxu0
        %v990 = vadd.f32 0.0, %v989
        %v991 = vpop.f32.mrb[0].mxu0
        %v992 = vpop.f32.mrb[0].mxu0
        %v993 = vadd.f32 0.0, %v992
        %v994 = vpop.f32.mrb[0].mxu0
        %995 = vdwg.mxu0
        %v996 = vadd.f32 %v815, %v966
        %v997 = vadd.f32 %v816, %v969
        %v998 = vadd.f32 %v817, %v974
        %v999 = vadd.f32 %v818, %v977
        %v1000 = vadd.f32 %v819, %v982
        %v1001 = vadd.f32 %v820, %v985
        %v1002 = vadd.f32 %v821, %v990
        %v1003 = vadd.f32 %v822, %v993
        %v1004 = vld [vmem:[%s287 + $0x1] sm:$0xff]
        %v1005 = vld [vmem:[%s287 + $0x11] sm:$0xff]
        %v1006 = vld [vmem:[%s287 + $0x21] sm:$0xff]
        %v1007 = vld [vmem:[%s287 + $0x31] sm:$0xff]
        %v1008 = vld [vmem:[%s287 + $0x41] sm:$0xff]
        %v1009 = vld [vmem:[%s287 + $0x51] sm:$0xff]
        %v1010 = vld [vmem:[%s287 + $0x61] sm:$0xff]
        %v1011 = vld [vmem:[%s287 + $0x71] sm:$0xff]
        %v1012 = vpack.c.bf16 %v1004, %v1004
        %v1013 = vpack.c.bf16 %v1005, %v1005
        %v1014 = vpack.c.bf16 %v1006, %v1006
        %v1015 = vpack.c.bf16 %v1007, %v1007
        %v1016 = vpack.c.bf16 %v1008, %v1008
        %v1017 = vpack.c.bf16 %v1009, %v1009
        %v1018 = vpack.c.bf16 %v1010, %v1010
        %v1019 = vpack.c.bf16 %v1011, %v1011
        %s1020 = sadd.s32 %s312, 4
        %s1021 = smul.u32 %s1020, 16
        %s1022 = smul.addr %s1021, 4
        %s1023 = scalar_lea.vmem [#allocation7], %s1022
        %v1024 = vld [vmem:[%s1023] sm:$0xf]
        %v1025 = vld [vmem:[%s1023 + $0x4] sm:$0xf]
        %v1026 = vld [vmem:[%s1023 + $0x8] sm:$0xf]
        %v1027 = vld [vmem:[%s1023 + $0xc] sm:$0xf]
        %v1028 = vld [vmem:[%s1023 + $0x10] sm:$0xf]
        %v1029 = vld [vmem:[%s1023 + $0x14] sm:$0xf]
        %v1030 = vld [vmem:[%s1023 + $0x18] sm:$0xf]
        %v1031 = vld [vmem:[%s1023 + $0x1c] sm:$0xf]
        %v1032 = vld [vmem:[%s1023 + $0x20] sm:$0xf]
        %v1033 = vld [vmem:[%s1023 + $0x24] sm:$0xf]
        %v1034 = vld [vmem:[%s1023 + $0x28] sm:$0xf]
        %v1035 = vld [vmem:[%s1023 + $0x2c] sm:$0xf]
        %v1036 = vld [vmem:[%s1023 + $0x30] sm:$0xf]
        %v1037 = vld [vmem:[%s1023 + $0x34] sm:$0xf]
        %v1038 = vld [vmem:[%s1023 + $0x38] sm:$0xf]
        %v1039 = vld [vmem:[%s1023 + $0x3c] sm:$0xf]
        %v1048 = vunpack.c.l.b16 %v1012
        %v1049 = vunpack.c.l.b16 %v1013
        %v1050 = vunpack.c.l.b16 %v1014
        %v1051 = vunpack.c.l.b16 %v1015
        %v1052 = vunpack.c.l.b16 %v1016
        %v1053 = vunpack.c.l.b16 %v1017
        %v1054 = vunpack.c.l.b16 %v1018
        %v1055 = vunpack.c.l.b16 %v1019
        %v1056 = vpack.c.b16 %v1049, %v1048
        %v1057 = vpack.c.b16 %v1051, %v1050
        %v1058 = vpack.c.b16 %v1053, %v1052
        %v1059 = vpack.c.b16 %v1055, %v1054
        %v1080 = vunpack.c.l.b16 %v1024
        %v1081 = vunpack.c.l.b16 %v1025
        %v1082 = vunpack.c.l.b16 %v1026
        %v1083 = vunpack.c.l.b16 %v1027
        %v1084 = vunpack.c.l.b16 %v1028
        %v1085 = vunpack.c.l.b16 %v1029
        %v1086 = vunpack.c.l.b16 %v1030
        %v1087 = vunpack.c.l.b16 %v1031
        %v1088 = vunpack.c.l.b16 %v1032
        %v1089 = vunpack.c.l.b16 %v1033
        %v1090 = vunpack.c.l.b16 %v1034
        %v1091 = vunpack.c.l.b16 %v1035
        %v1092 = vunpack.c.l.b16 %v1036
        %v1093 = vunpack.c.l.b16 %v1037
        %v1094 = vunpack.c.l.b16 %v1038
        %v1095 = vunpack.c.l.b16 %v1039
        %v1096 = vpack.c.b16 %v1081, %v1080
        %v1097 = vpack.c.b16 %v1083, %v1082
        %v1098 = vpack.c.b16 %v1085, %v1084
        %v1099 = vpack.c.b16 %v1087, %v1086
        %v1100 = vpack.c.b16 %v1089, %v1088
        %v1101 = vpack.c.b16 %v1091, %v1090
        %v1102 = vpack.c.b16 %v1093, %v1092
        %v1103 = vpack.c.b16 %v1095, %v1094
        %1112 = vmatprep.subr.bf16.mxu0 0
        %1113 = vmatpush1.bf16.msra.mxu0 %v1096
        %1114 = vmatprep.subr.bf16.mxu0 0
        %1115 = vmatpush1.bf16.msra.mxu0 %v1097
        %1116 = vmatprep.subr.bf16.mxu0 0
        %1117 = vmatpush1.bf16.msra.mxu0 %v1098
        %1118 = vmatprep.subr.bf16.mxu0 0
        %1119 = vmatpush1.bf16.msra.mxu0 %v1099
        %1120 = vmatprep.subr.bf16.mxu0 0
        %1121 = vmatpush1.bf16.msra.mxu0 %v1100
        %1122 = vmatprep.subr.bf16.mxu0 0
        %1123 = vmatpush1.bf16.msra.mxu0 %v1101
        %1124 = vmatprep.subr.bf16.mxu0 0
        %1125 = vmatpush1.bf16.msra.mxu0 %v1102
        %1126 = vmatprep.subr.bf16.mxu0 0
        %1127 = vmatpush1.bf16.msra.mxu0 %v1103
        %1128 = vmatprep.subr.bf16.mxu0 0
        %1129 = vmatpush1.bf16.msra.mxu0 0
        %1130 = vmatprep.subr.bf16.mxu0 0
        %1131 = vmatpush1.bf16.msra.mxu0 0
        %1132 = vmatprep.subr.bf16.mxu0 0
        %1133 = vmatpush1.bf16.msra.mxu0 0
        %1134 = vmatprep.subr.bf16.mxu0 0
        %1135 = vmatpush1.bf16.msra.mxu0 0
        %1136 = vmatprep.subr.bf16.mxu0 0
        %1137 = vmatpush1.bf16.msra.mxu0 0
        %1138 = vmatprep.subr.bf16.mxu0 0
        %1139 = vmatpush1.bf16.msra.mxu0 0
        %1140 = vmatprep.subr.bf16.mxu0 0
        %1141 = vmatpush1.bf16.msra.mxu0 0
        %1142 = vmatprep.subr.bf16.mxu0 0
        %1143 = vmatpush1.bf16.msra.mxu0 0
        %1144 = vmatprep.mubr.bf16.mxu0 0
        %1145 = vmatmul.mubr.bf16.gmra.mrb[0].mxu0 %v1056
        %v1146 = vpop.f32.mrb[0].mxu0
        %v1147 = vadd.f32 0.0, %v1146
        %v1148 = vpop.f32.mrb[0].mxu0
        %v1149 = vpop.f32.mrb[0].mxu0
        %v1150 = vadd.f32 0.0, %v1149
        %v1151 = vpop.f32.mrb[0].mxu0
        %1152 = vmatprep.mubr.bf16.mxu0 0
        %1153 = vmatmul.mubr.bf16.gmra.mrb[0].mxu0 %v1057
        %v1154 = vpop.f32.mrb[0].mxu0
        %v1155 = vadd.f32 0.0, %v1154
        %v1156 = vpop.f32.mrb[0].mxu0
        %v1157 = vpop.f32.mrb[0].mxu0
        %v1158 = vadd.f32 0.0, %v1157
        %v1159 = vpop.f32.mrb[0].mxu0
        %1160 = vmatprep.mubr.bf16.mxu0 0
        %1161 = vmatmul.mubr.bf16.gmra.mrb[0].mxu0 %v1058
        %v1162 = vpop.f32.mrb[0].mxu0
        %v1163 = vadd.f32 0.0, %v1162
        %v1164 = vpop.f32.mrb[0].mxu0
        %v1165 = vpop.f32.mrb[0].mxu0
        %v1166 = vadd.f32 0.0, %v1165
        %v1167 = vpop.f32.mrb[0].mxu0
        %1168 = vmatprep.mubr.bf16.mxu0 0
        %1169 = vmatmul.mubr.bf16.gmra.mrb[0].mxu0 %v1059
        %v1170 = vpop.f32.mrb[0].mxu0
        %v1171 = vadd.f32 0.0, %v1170
        %v1172 = vpop.f32.mrb[0].mxu0
        %v1173 = vpop.f32.mrb[0].mxu0
        %v1174 = vadd.f32 0.0, %v1173
        %v1175 = vpop.f32.mrb[0].mxu0
        %1176 = vdwg.mxu0
        %v1177 = vadd.f32 %v996, %v1147
        %v1178 = vadd.f32 %v997, %v1150
        %v1179 = vadd.f32 %v998, %v1155
        %v1180 = vadd.f32 %v999, %v1158
        %v1181 = vadd.f32 %v1000, %v1163
        %v1182 = vadd.f32 %v1001, %v1166
        %v1183 = vadd.f32 %v1002, %v1171
        %v1184 = vadd.f32 %v1003, %v1174
        %v1185 = vld [vmem:[%s287 + $0x2] sm:$0xff]
        %v1186 = vld [vmem:[%s287 + $0x12] sm:$0xff]
        %v1187 = vld [vmem:[%s287 + $0x22] sm:$0xff]
        %v1188 = vld [vmem:[%s287 + $0x32] sm:$0xff]
        %v1189 = vld [vmem:[%s287 + $0x42] sm:$0xff]
        %v1190 = vld [vmem:[%s287 + $0x52] sm:$0xff]
        %v1191 = vld [vmem:[%s287 + $0x62] sm:$0xff]
        %v1192 = vld [vmem:[%s287 + $0x72] sm:$0xff]
        %v1193 = vpack.c.bf16 %v1185, %v1185
        %v1194 = vpack.c.bf16 %v1186, %v1186
        %v1195 = vpack.c.bf16 %v1187, %v1187
        %v1196 = vpack.c.bf16 %v1188, %v1188
        %v1197 = vpack.c.bf16 %v1189, %v1189
        %v1198 = vpack.c.bf16 %v1190, %v1190
        %v1199 = vpack.c.bf16 %v1191, %v1191
        %v1200 = vpack.c.bf16 %v1192, %v1192
        %s1201 = sadd.s32 %s312, 5
        %s1202 = smul.u32 %s1201, 16
        %s1203 = smul.addr %s1202, 4
        %s1204 = scalar_lea.vmem [#allocation7], %s1203
        %v1205 = vld [vmem:[%s1204] sm:$0xf]
        %v1206 = vld [vmem:[%s1204 + $0x4] sm:$0xf]
        %v1207 = vld [vmem:[%s1204 + $0x8] sm:$0xf]
        %v1208 = vld [vmem:[%s1204 + $0xc] sm:$0xf]
        %v1209 = vld [vmem:[%s1204 + $0x10] sm:$0xf]
        %v1210 = vld [vmem:[%s1204 + $0x14] sm:$0xf]
        %v1211 = vld [vmem:[%s1204 + $0x18] sm:$0xf]
        %v1212 = vld [vmem:[%s1204 + $0x1c] sm:$0xf]
        %v1213 = vld [vmem:[%s1204 + $0x20] sm:$0xf]
        %v1214 = vld [vmem:[%s1204 + $0x24] sm:$0xf]
        %v1215 = vld [vmem:[%s1204 + $0x28] sm:$0xf]
        %v1216 = vld [vmem:[%s1204 + $0x2c] sm:$0xf]
        %v1217 = vld [vmem:[%s1204 + $0x30] sm:$0xf]
        %v1218 = vld [vmem:[%s1204 + $0x34] sm:$0xf]
        %v1219 = vld [vmem:[%s1204 + $0x38] sm:$0xf]
        %v1220 = vld [vmem:[%s1204 + $0x3c] sm:$0xf]
        %v1229 = vunpack.c.l.b16 %v1193
        %v1230 = vunpack.c.l.b16 %v1194
        %v1231 = vunpack.c.l.b16 %v1195
        %v1232 = vunpack.c.l.b16 %v1196
        %v1233 = vunpack.c.l.b16 %v1197
        %v1234 = vunpack.c.l.b16 %v1198
        %v1235 = vunpack.c.l.b16 %v1199
        %v1236 = vunpack.c.l.b16 %v1200
        %v1237 = vpack.c.b16 %v1230, %v1229
        %v1238 = vpack.c.b16 %v1232, %v1231
        %v1239 = vpack.c.b16 %v1234, %v1233
        %v1240 = vpack.c.b16 %v1236, %v1235
        %v1261 = vunpack.c.l.b16 %v1205
        %v1262 = vunpack.c.l.b16 %v1206
        %v1263 = vunpack.c.l.b16 %v1207
        %v1264 = vunpack.c.l.b16 %v1208
        %v1265 = vunpack.c.l.b16 %v1209
        %v1266 = vunpack.c.l.b16 %v1210
        %v1267 = vunpack.c.l.b16 %v1211
        %v1268 = vunpack.c.l.b16 %v1212
        %v1269 = vunpack.c.l.b16 %v1213
        %v1270 = vunpack.c.l.b16 %v1214
        %v1271 = vunpack.c.l.b16 %v1215
        %v1272 = vunpack.c.l.b16 %v1216
        %v1273 = vunpack.c.l.b16 %v1217
        %v1274 = vunpack.c.l.b16 %v1218
        %v1275 = vunpack.c.l.b16 %v1219
        %v1276 = vunpack.c.l.b16 %v1220
        %v1277 = vpack.c.b16 %v1262, %v1261
        %v1278 = vpack.c.b16 %v1264, %v1263
        %v1279 = vpack.c.b16 %v1266, %v1265
        %v1280 = vpack.c.b16 %v1268, %v1267
        %v1281 = vpack.c.b16 %v1270, %v1269
        %v1282 = vpack.c.b16 %v1272, %v1271
        %v1283 = vpack.c.b16 %v1274, %v1273
        %v1284 = vpack.c.b16 %v1276, %v1275
        %1293 = vmatprep.subr.bf16.mxu0 0
        %1294 = vmatpush1.bf16.msra.mxu0 %v1277
        %1295 = vmatprep.subr.bf16.mxu0 0
        %1296 = vmatpush1.bf16.msra.mxu0 %v1278
        %1297 = vmatprep.subr.bf16.mxu0 0
        %1298 = vmatpush1.bf16.msra.mxu0 %v1279
        %1299 = vmatprep.subr.bf16.mxu0 0
        %1300 = vmatpush1.bf16.msra.mxu0 %v1280
        %1301 = vmatprep.subr.bf16.mxu0 0
        %1302 = vmatpush1.bf16.msra.mxu0 %v1281
        %1303 = vmatprep.subr.bf16.mxu0 0
        %1304 = vmatpush1.bf16.msra.mxu0 %v1282
        %1305 = vmatprep.subr.bf16.mxu0 0
        %1306 = vmatpush1.bf16.msra.mxu0 %v1283
        %1307 = vmatprep.subr.bf16.mxu0 0
        %1308 = vmatpush1.bf16.msra.mxu0 %v1284
        %1309 = vmatprep.subr.bf16.mxu0 0
        %1310 = vmatpush1.bf16.msra.mxu0 0
        %1311 = vmatprep.subr.bf16.mxu0 0
        %1312 = vmatpush1.bf16.msra.mxu0 0
        %1313 = vmatprep.subr.bf16.mxu0 0
        %1314 = vmatpush1.bf16.msra.mxu0 0
        %1315 = vmatprep.subr.bf16.mxu0 0
        %1316 = vmatpush1.bf16.msra.mxu0 0
        %1317 = vmatprep.subr.bf16.mxu0 0
        %1318 = vmatpush1.bf16.msra.mxu0 0
        %1319 = vmatprep.subr.bf16.mxu0 0
        %1320 = vmatpush1.bf16.msra.mxu0 0
        %1321 = vmatprep.subr.bf16.mxu0 0
        %1322 = vmatpush1.bf16.msra.mxu0 0
        %1323 = vmatprep.subr.bf16.mxu0 0
        %1324 = vmatpush1.bf16.msra.mxu0 0
        %1325 = vmatprep.mubr.bf16.mxu0 0
        %1326 = vmatmul.mubr.bf16.gmra.mrb[0].mxu0 %v1237
        %v1327 = vpop.f32.mrb[0].mxu0
        %v1328 = vadd.f32 0.0, %v1327
        %v1329 = vpop.f32.mrb[0].mxu0
        %v1330 = vpop.f32.mrb[0].mxu0
        %v1331 = vadd.f32 0.0, %v1330
        %v1332 = vpop.f32.mrb[0].mxu0
        %1333 = vmatprep.mubr.bf16.mxu0 0
        %1334 = vmatmul.mubr.bf16.gmra.mrb[0].mxu0 %v1238
        %v1335 = vpop.f32.mrb[0].mxu0
        %v1336 = vadd.f32 0.0, %v1335
        %v1337 = vpop.f32.mrb[0].mxu0
        %v1338 = vpop.f32.mrb[0].mxu0
        %v1339 = vadd.f32 0.0, %v1338
        %v1340 = vpop.f32.mrb[0].mxu0
        %1341 = vmatprep.mubr.bf16.mxu0 0
        %1342 = vmatmul.mubr.bf16.gmra.mrb[0].mxu0 %v1239
        %v1343 = vpop.f32.mrb[0].mxu0
        %v1344 = vadd.f32 0.0, %v1343
        %v1345 = vpop.f32.mrb[0].mxu0
        %v1346 = vpop.f32.mrb[0].mxu0
        %v1347 = vadd.f32 0.0, %v1346
        %v1348 = vpop.f32.mrb[0].mxu0
        %1349 = vmatprep.mubr.bf16.mxu0 0
        %1350 = vmatmul.mubr.bf16.gmra.mrb[0].mxu0 %v1240
        %v1351 = vpop.f32.mrb[0].mxu0
        %v1352 = vadd.f32 0.0, %v1351
        %v1353 = vpop.f32.mrb[0].mxu0
        %v1354 = vpop.f32.mrb[0].mxu0
        %v1355 = vadd.f32 0.0, %v1354
        %v1356 = vpop.f32.mrb[0].mxu0
        %1357 = vdwg.mxu0
        %v1358 = vadd.f32 %v1177, %v1328
        %v1359 = vadd.f32 %v1178, %v1331
        %v1360 = vadd.f32 %v1179, %v1336
        %v1361 = vadd.f32 %v1180, %v1339
        %v1362 = vadd.f32 %v1181, %v1344
        %v1363 = vadd.f32 %v1182, %v1347
        %v1364 = vadd.f32 %v1183, %v1352
        %v1365 = vadd.f32 %v1184, %v1355
        %s1366 = scalar_lea.vmem [#allocation3], 32
        %v1367 = vld [vmem:[%s1366] sm:$0xff]
        %v1368 = vld [vmem:[%s1366 + $0x10] sm:$0xff]
        %v1369 = vld [vmem:[%s1366 + $0x20] sm:$0xff]
        %v1370 = vld [vmem:[%s1366 + $0x30] sm:$0xff]
        %v1371 = vld [vmem:[%s1366 + $0x40] sm:$0xff]
        %v1372 = vld [vmem:[%s1366 + $0x50] sm:$0xff]
        %v1373 = vld [vmem:[%s1366 + $0x60] sm:$0xff]
        %v1374 = vld [vmem:[%s1366 + $0x70] sm:$0xff]
        %v1375 = vpack.c.bf16 %v1367, %v1367
        %v1376 = vpack.c.bf16 %v1368, %v1368
        %v1377 = vpack.c.bf16 %v1369, %v1369
        %v1378 = vpack.c.bf16 %v1370, %v1370
        %v1379 = vpack.c.bf16 %v1371, %v1371
        %v1380 = vpack.c.bf16 %v1372, %v1372
        %v1381 = vpack.c.bf16 %v1373, %v1373
        %v1382 = vpack.c.bf16 %v1374, %v1374
        %s1383 = sadd.s32 %s312, 6
        %s1384 = smul.u32 %s1383, 16
        %s1385 = smul.addr %s1384, 4
        %s1386 = scalar_lea.vmem [#allocation7], %s1385
        %v1387 = vld [vmem:[%s1386] sm:$0xf]
        %v1388 = vld [vmem:[%s1386 + $0x4] sm:$0xf]
        %v1389 = vld [vmem:[%s1386 + $0x8] sm:$0xf]
        %v1390 = vld [vmem:[%s1386 + $0xc] sm:$0xf]
        %v1391 = vld [vmem:[%s1386 + $0x10] sm:$0xf]
        %v1392 = vld [vmem:[%s1386 + $0x14] sm:$0xf]
        %v1393 = vld [vmem:[%s1386 + $0x18] sm:$0xf]
        %v1394 = vld [vmem:[%s1386 + $0x1c] sm:$0xf]
        %v1395 = vld [vmem:[%s1386 + $0x20] sm:$0xf]
        %v1396 = vld [vmem:[%s1386 + $0x24] sm:$0xf]
        %v1397 = vld [vmem:[%s1386 + $0x28] sm:$0xf]
        %v1398 = vld [vmem:[%s1386 + $0x2c] sm:$0xf]
        %v1399 = vld [vmem:[%s1386 + $0x30] sm:$0xf]
        %v1400 = vld [vmem:[%s1386 + $0x34] sm:$0xf]
        %v1401 = vld [vmem:[%s1386 + $0x38] sm:$0xf]
        %v1402 = vld [vmem:[%s1386 + $0x3c] sm:$0xf]
        %v1411 = vunpack.c.l.b16 %v1375
        %v1412 = vunpack.c.l.b16 %v1376
        %v1413 = vunpack.c.l.b16 %v1377
        %v1414 = vunpack.c.l.b16 %v1378
        %v1415 = vunpack.c.l.b16 %v1379
        %v1416 = vunpack.c.l.b16 %v1380
        %v1417 = vunpack.c.l.b16 %v1381
        %v1418 = vunpack.c.l.b16 %v1382
        %v1419 = vpack.c.b16 %v1412, %v1411
        %v1420 = vpack.c.b16 %v1414, %v1413
        %v1421 = vpack.c.b16 %v1416, %v1415
        %v1422 = vpack.c.b16 %v1418, %v1417
        %v1443 = vunpack.c.l.b16 %v1387
        %v1444 = vunpack.c.l.b16 %v1388
        %v1445 = vunpack.c.l.b16 %v1389
        %v1446 = vunpack.c.l.b16 %v1390
        %v1447 = vunpack.c.l.b16 %v1391
        %v1448 = vunpack.c.l.b16 %v1392
        %v1449 = vunpack.c.l.b16 %v1393
        %v1450 = vunpack.c.l.b16 %v1394
        %v1451 = vunpack.c.l.b16 %v1395
        %v1452 = vunpack.c.l.b16 %v1396
        %v1453 = vunpack.c.l.b16 %v1397
        %v1454 = vunpack.c.l.b16 %v1398
        %v1455 = vunpack.c.l.b16 %v1399
        %v1456 = vunpack.c.l.b16 %v1400
        %v1457 = vunpack.c.l.b16 %v1401
        %v1458 = vunpack.c.l.b16 %v1402
        %v1459 = vpack.c.b16 %v1444, %v1443
        %v1460 = vpack.c.b16 %v1446, %v1445
        %v1461 = vpack.c.b16 %v1448, %v1447
        %v1462 = vpack.c.b16 %v1450, %v1449
        %v1463 = vpack.c.b16 %v1452, %v1451
        %v1464 = vpack.c.b16 %v1454, %v1453
        %v1465 = vpack.c.b16 %v1456, %v1455
        %v1466 = vpack.c.b16 %v1458, %v1457
        %1475 = vmatprep.subr.bf16.mxu0 0
        %1476 = vmatpush1.bf16.msra.mxu0 %v1459
        %1477 = vmatprep.subr.bf16.mxu0 0
        %1478 = vmatpush1.bf16.msra.mxu0 %v1460
        %1479 = vmatprep.subr.bf16.mxu0 0
        %1480 = vmatpush1.bf16.msra.mxu0 %v1461
        %1481 = vmatprep.subr.bf16.mxu0 0
        %1482 = vmatpush1.bf16.msra.mxu0 %v1462
        %1483 = vmatprep.subr.bf16.mxu0 0
        %1484 = vmatpush1.bf16.msra.mxu0 %v1463
        %1485 = vmatprep.subr.bf16.mxu0 0
        %1486 = vmatpush1.bf16.msra.mxu0 %v1464
        %1487 = vmatprep.subr.bf16.mxu0 0
        %1488 = vmatpush1.bf16.msra.mxu0 %v1465
        %1489 = vmatprep.subr.bf16.mxu0 0
        %1490 = vmatpush1.bf16.msra.mxu0 %v1466
        %1491 = vmatprep.subr.bf16.mxu0 0
        %1492 = vmatpush1.bf16.msra.mxu0 0
        %1493 = vmatprep.subr.bf16.mxu0 0
        %1494 = vmatpush1.bf16.msra.mxu0 0
        %1495 = vmatprep.subr.bf16.mxu0 0
        %1496 = vmatpush1.bf16.msra.mxu0 0
        %1497 = vmatprep.subr.bf16.mxu0 0
        %1498 = vmatpush1.bf16.msra.mxu0 0
        %1499 = vmatprep.subr.bf16.mxu0 0
        %1500 = vmatpush1.bf16.msra.mxu0 0
        %1501 = vmatprep.subr.bf16.mxu0 0
        %1502 = vmatpush1.bf16.msra.mxu0 0
        %1503 = vmatprep.subr.bf16.mxu0 0
        %1504 = vmatpush1.bf16.msra.mxu0 0
        %1505 = vmatprep.subr.bf16.mxu0 0
        %1506 = vmatpush1.bf16.msra.mxu0 0
        %1507 = vmatprep.mubr.bf16.mxu0 0
        %1508 = vmatmul.mubr.bf16.gmra.mrb[0].mxu0 %v1419
        %v1509 = vpop.f32.mrb[0].mxu0
        %v1510 = vadd.f32 0.0, %v1509
        %v1511 = vpop.f32.mrb[0].mxu0
        %v1512 = vpop.f32.mrb[0].mxu0
        %v1513 = vadd.f32 0.0, %v1512
        %v1514 = vpop.f32.mrb[0].mxu0
        %1515 = vmatprep.mubr.bf16.mxu0 0
        %1516 = vmatmul.mubr.bf16.gmra.mrb[0].mxu0 %v1420
        %v1517 = vpop.f32.mrb[0].mxu0
        %v1518 = vadd.f32 0.0, %v1517
        %v1519 = vpop.f32.mrb[0].mxu0
        %v1520 = vpop.f32.mrb[0].mxu0
        %v1521 = vadd.f32 0.0, %v1520
        %v1522 = vpop.f32.mrb[0].mxu0
        %1523 = vmatprep.mubr.bf16.mxu0 0
        %1524 = vmatmul.mubr.bf16.gmra.mrb[0].mxu0 %v1421
        %v1525 = vpop.f32.mrb[0].mxu0
        %v1526 = vadd.f32 0.0, %v1525
        %v1527 = vpop.f32.mrb[0].mxu0
        %v1528 = vpop.f32.mrb[0].mxu0
        %v1529 = vadd.f32 0.0, %v1528
        %v1530 = vpop.f32.mrb[0].mxu0
        %1531 = vmatprep.mubr.bf16.mxu0 0
        %1532 = vmatmul.mubr.bf16.gmra.mrb[0].mxu0 %v1422
        %v1533 = vpop.f32.mrb[0].mxu0
        %v1534 = vadd.f32 0.0, %v1533
        %v1535 = vpop.f32.mrb[0].mxu0
        %v1536 = vpop.f32.mrb[0].mxu0
        %v1537 = vadd.f32 0.0, %v1536
        %v1538 = vpop.f32.mrb[0].mxu0
        %1539 = vdwg.mxu0
        %v1540 = vadd.f32 %v1358, %v1510
        %v1541 = vadd.f32 %v1359, %v1513
        %v1542 = vadd.f32 %v1360, %v1518
        %v1543 = vadd.f32 %v1361, %v1521
        %v1544 = vadd.f32 %v1362, %v1526
        %v1545 = vadd.f32 %v1363, %v1529
        %v1546 = vadd.f32 %v1364, %v1534
        %v1547 = vadd.f32 %v1365, %v1537
        %v1548 = vld [vmem:[%s1366 + $0x1] sm:$0xff]
        %v1549 = vld [vmem:[%s1366 + $0x11] sm:$0xff]
        %v1550 = vld [vmem:[%s1366 + $0x21] sm:$0xff]
        %v1551 = vld [vmem:[%s1366 + $0x31] sm:$0xff]
        %v1552 = vld [vmem:[%s1366 + $0x41] sm:$0xff]
        %v1553 = vld [vmem:[%s1366 + $0x51] sm:$0xff]
        %v1554 = vld [vmem:[%s1366 + $0x61] sm:$0xff]
        %v1555 = vld [vmem:[%s1366 + $0x71] sm:$0xff]
        %v1556 = vpack.c.bf16 %v1548, %v1548
        %v1557 = vpack.c.bf16 %v1549, %v1549
        %v1558 = vpack.c.bf16 %v1550, %v1550
        %v1559 = vpack.c.bf16 %v1551, %v1551
        %v1560 = vpack.c.bf16 %v1552, %v1552
        %v1561 = vpack.c.bf16 %v1553, %v1553
        %v1562 = vpack.c.bf16 %v1554, %v1554
        %v1563 = vpack.c.bf16 %v1555, %v1555
        %s1564 = sadd.s32 %s312, 7
        %s1565 = smul.u32 %s1564, 16
        %s1566 = smul.addr %s1565, 4
        %s1567 = scalar_lea.vmem [#allocation7], %s1566
        %v1568 = vld [vmem:[%s1567] sm:$0xf]
        %v1569 = vld [vmem:[%s1567 + $0x4] sm:$0xf]
        %v1570 = vld [vmem:[%s1567 + $0x8] sm:$0xf]
        %v1571 = vld [vmem:[%s1567 + $0xc] sm:$0xf]
        %v1572 = vld [vmem:[%s1567 + $0x10] sm:$0xf]
        %v1573 = vld [vmem:[%s1567 + $0x14] sm:$0xf]
        %v1574 = vld [vmem:[%s1567 + $0x18] sm:$0xf]
        %v1575 = vld [vmem:[%s1567 + $0x1c] sm:$0xf]
        %v1576 = vld [vmem:[%s1567 + $0x20] sm:$0xf]
        %v1577 = vld [vmem:[%s1567 + $0x24] sm:$0xf]
        %v1578 = vld [vmem:[%s1567 + $0x28] sm:$0xf]
        %v1579 = vld [vmem:[%s1567 + $0x2c] sm:$0xf]
        %v1580 = vld [vmem:[%s1567 + $0x30] sm:$0xf]
        %v1581 = vld [vmem:[%s1567 + $0x34] sm:$0xf]
        %v1582 = vld [vmem:[%s1567 + $0x38] sm:$0xf]
        %v1583 = vld [vmem:[%s1567 + $0x3c] sm:$0xf]
        %v1592 = vunpack.c.l.b16 %v1556
        %v1593 = vunpack.c.l.b16 %v1557
        %v1594 = vunpack.c.l.b16 %v1558
        %v1595 = vunpack.c.l.b16 %v1559
        %v1596 = vunpack.c.l.b16 %v1560
        %v1597 = vunpack.c.l.b16 %v1561
        %v1598 = vunpack.c.l.b16 %v1562
        %v1599 = vunpack.c.l.b16 %v1563
        %v1600 = vpack.c.b16 %v1593, %v1592
        %v1601 = vpack.c.b16 %v1595, %v1594
        %v1602 = vpack.c.b16 %v1597, %v1596
        %v1603 = vpack.c.b16 %v1599, %v1598
        %v1624 = vunpack.c.l.b16 %v1568
        %v1625 = vunpack.c.l.b16 %v1569
        %v1626 = vunpack.c.l.b16 %v1570
        %v1627 = vunpack.c.l.b16 %v1571
        %v1628 = vunpack.c.l.b16 %v1572
        %v1629 = vunpack.c.l.b16 %v1573
        %v1630 = vunpack.c.l.b16 %v1574
        %v1631 = vunpack.c.l.b16 %v1575
        %v1632 = vunpack.c.l.b16 %v1576
        %v1633 = vunpack.c.l.b16 %v1577
        %v1634 = vunpack.c.l.b16 %v1578
        %v1635 = vunpack.c.l.b16 %v1579
        %v1636 = vunpack.c.l.b16 %v1580
        %v1637 = vunpack.c.l.b16 %v1581
        %v1638 = vunpack.c.l.b16 %v1582
        %v1639 = vunpack.c.l.b16 %v1583
        %v1640 = vpack.c.b16 %v1625, %v1624
        %v1641 = vpack.c.b16 %v1627, %v1626
        %v1642 = vpack.c.b16 %v1629, %v1628
        %v1643 = vpack.c.b16 %v1631, %v1630
        %v1644 = vpack.c.b16 %v1633, %v1632
        %v1645 = vpack.c.b16 %v1635, %v1634
        %v1646 = vpack.c.b16 %v1637, %v1636
        %v1647 = vpack.c.b16 %v1639, %v1638
        %1656 = vmatprep.subr.bf16.mxu0 0
        %1657 = vmatpush1.bf16.msra.mxu0 %v1640
        %1658 = vmatprep.subr.bf16.mxu0 0
        %1659 = vmatpush1.bf16.msra.mxu0 %v1641
        %1660 = vmatprep.subr.bf16.mxu0 0
        %1661 = vmatpush1.bf16.msra.mxu0 %v1642
        %1662 = vmatprep.subr.bf16.mxu0 0
        %1663 = vmatpush1.bf16.msra.mxu0 %v1643
        %1664 = vmatprep.subr.bf16.mxu0 0
        %1665 = vmatpush1.bf16.msra.mxu0 %v1644
        %1666 = vmatprep.subr.bf16.mxu0 0
        %1667 = vmatpush1.bf16.msra.mxu0 %v1645
        %1668 = vmatprep.subr.bf16.mxu0 0
        %1669 = vmatpush1.bf16.msra.mxu0 %v1646
        %1670 = vmatprep.subr.bf16.mxu0 0
        %1671 = vmatpush1.bf16.msra.mxu0 %v1647
        %1672 = vmatprep.subr.bf16.mxu0 0
        %1673 = vmatpush1.bf16.msra.mxu0 0
        %1674 = vmatprep.subr.bf16.mxu0 0
        %1675 = vmatpush1.bf16.msra.mxu0 0
        %1676 = vmatprep.subr.bf16.mxu0 0
        %1677 = vmatpush1.bf16.msra.mxu0 0
        %1678 = vmatprep.subr.bf16.mxu0 0
        %1679 = vmatpush1.bf16.msra.mxu0 0
        %1680 = vmatprep.subr.bf16.mxu0 0
        %1681 = vmatpush1.bf16.msra.mxu0 0
        %1682 = vmatprep.subr.bf16.mxu0 0
        %1683 = vmatpush1.bf16.msra.mxu0 0
        %1684 = vmatprep.subr.bf16.mxu0 0
        %1685 = vmatpush1.bf16.msra.mxu0 0
        %1686 = vmatprep.subr.bf16.mxu0 0
        %1687 = vmatpush1.bf16.msra.mxu0 0
        %1688 = vmatprep.mubr.bf16.mxu0 0
        %1689 = vmatmul.mubr.bf16.gmra.mrb[0].mxu0 %v1600
        %v1690 = vpop.f32.mrb[0].mxu0
        %v1691 = vadd.f32 0.0, %v1690
        %v1692 = vpop.f32.mrb[0].mxu0
        %v1693 = vpop.f32.mrb[0].mxu0
        %v1694 = vadd.f32 0.0, %v1693
        %v1695 = vpop.f32.mrb[0].mxu0
        %1696 = vmatprep.mubr.bf16.mxu0 0
        %1697 = vmatmul.mubr.bf16.gmra.mrb[0].mxu0 %v1601
        %v1698 = vpop.f32.mrb[0].mxu0
        %v1699 = vadd.f32 0.0, %v1698
        %v1700 = vpop.f32.mrb[0].mxu0
        %v1701 = vpop.f32.mrb[0].mxu0
        %v1702 = vadd.f32 0.0, %v1701
        %v1703 = vpop.f32.mrb[0].mxu0
        %1704 = vmatprep.mubr.bf16.mxu0 0
        %1705 = vmatmul.mubr.bf16.gmra.mrb[0].mxu0 %v1602
        %v1706 = vpop.f32.mrb[0].mxu0
        %v1707 = vadd.f32 0.0, %v1706
        %v1708 = vpop.f32.mrb[0].mxu0
        %v1709 = vpop.f32.mrb[0].mxu0
        %v1710 = vadd.f32 0.0, %v1709
        %v1711 = vpop.f32.mrb[0].mxu0
        %1712 = vmatprep.mubr.bf16.mxu0 0
        %1713 = vmatmul.mubr.bf16.gmra.mrb[0].mxu0 %v1603
        %v1714 = vpop.f32.mrb[0].mxu0
        %v1715 = vadd.f32 0.0, %v1714
        %v1716 = vpop.f32.mrb[0].mxu0
        %v1717 = vpop.f32.mrb[0].mxu0
        %v1718 = vadd.f32 0.0, %v1717
        %v1719 = vpop.f32.mrb[0].mxu0
        %1720 = vdwg.mxu0
        %v1721 = vadd.f32 %v1540, %v1691
        %v1722 = vadd.f32 %v1541, %v1694
        %v1723 = vadd.f32 %v1542, %v1699
        %v1724 = vadd.f32 %v1543, %v1702
        %v1725 = vadd.f32 %v1544, %v1707
        %v1726 = vadd.f32 %v1545, %v1710
        %v1727 = vadd.f32 %v1546, %v1715
        %v1728 = vadd.f32 %v1547, %v1718
        %v1729 = vld [vmem:[%s1366 + $0x2] sm:$0xff]
        %v1730 = vld [vmem:[%s1366 + $0x12] sm:$0xff]
        %v1731 = vld [vmem:[%s1366 + $0x22] sm:$0xff]
        %v1732 = vld [vmem:[%s1366 + $0x32] sm:$0xff]
        %v1733 = vld [vmem:[%s1366 + $0x42] sm:$0xff]
        %v1734 = vld [vmem:[%s1366 + $0x52] sm:$0xff]
        %v1735 = vld [vmem:[%s1366 + $0x62] sm:$0xff]
        %v1736 = vld [vmem:[%s1366 + $0x72] sm:$0xff]
        %v1737 = vpack.c.bf16 %v1729, %v1729
        %v1738 = vpack.c.bf16 %v1730, %v1730
        %v1739 = vpack.c.bf16 %v1731, %v1731
        %v1740 = vpack.c.bf16 %v1732, %v1732
        %v1741 = vpack.c.bf16 %v1733, %v1733
        %v1742 = vpack.c.bf16 %v1734, %v1734
        %v1743 = vpack.c.bf16 %v1735, %v1735
        %v1744 = vpack.c.bf16 %v1736, %v1736
        %s1745 = sadd.s32 %s312, 8
        %s1746 = smul.u32 %s1745, 16
        %s1747 = smul.addr %s1746, 4
        %s1748 = scalar_lea.vmem [#allocation7], %s1747
        %v1749 = vld [vmem:[%s1748] sm:$0xf]
        %v1750 = vld [vmem:[%s1748 + $0x4] sm:$0xf]
        %v1751 = vld [vmem:[%s1748 + $0x8] sm:$0xf]
        %v1752 = vld [vmem:[%s1748 + $0xc] sm:$0xf]
        %v1753 = vld [vmem:[%s1748 + $0x10] sm:$0xf]
        %v1754 = vld [vmem:[%s1748 + $0x14] sm:$0xf]
        %v1755 = vld [vmem:[%s1748 + $0x18] sm:$0xf]
        %v1756 = vld [vmem:[%s1748 + $0x1c] sm:$0xf]
        %v1757 = vld [vmem:[%s1748 + $0x20] sm:$0xf]
        %v1758 = vld [vmem:[%s1748 + $0x24] sm:$0xf]
        %v1759 = vld [vmem:[%s1748 + $0x28] sm:$0xf]
        %v1760 = vld [vmem:[%s1748 + $0x2c] sm:$0xf]
        %v1761 = vld [vmem:[%s1748 + $0x30] sm:$0xf]
        %v1762 = vld [vmem:[%s1748 + $0x34] sm:$0xf]
        %v1763 = vld [vmem:[%s1748 + $0x38] sm:$0xf]
        %v1764 = vld [vmem:[%s1748 + $0x3c] sm:$0xf]
        %v1773 = vunpack.c.l.b16 %v1737
        %v1774 = vunpack.c.l.b16 %v1738
        %v1775 = vunpack.c.l.b16 %v1739
        %v1776 = vunpack.c.l.b16 %v1740
        %v1777 = vunpack.c.l.b16 %v1741
        %v1778 = vunpack.c.l.b16 %v1742
        %v1779 = vunpack.c.l.b16 %v1743
        %v1780 = vunpack.c.l.b16 %v1744
        %v1781 = vpack.c.b16 %v1774, %v1773
        %v1782 = vpack.c.b16 %v1776, %v1775
        %v1783 = vpack.c.b16 %v1778, %v1777
        %v1784 = vpack.c.b16 %v1780, %v1779
        %v1805 = vunpack.c.l.b16 %v1749
        %v1806 = vunpack.c.l.b16 %v1750
        %v1807 = vunpack.c.l.b16 %v1751
        %v1808 = vunpack.c.l.b16 %v1752
        %v1809 = vunpack.c.l.b16 %v1753
        %v1810 = vunpack.c.l.b16 %v1754
        %v1811 = vunpack.c.l.b16 %v1755
        %v1812 = vunpack.c.l.b16 %v1756
        %v1813 = vunpack.c.l.b16 %v1757
        %v1814 = vunpack.c.l.b16 %v1758
        %v1815 = vunpack.c.l.b16 %v1759
        %v1816 = vunpack.c.l.b16 %v1760
        %v1817 = vunpack.c.l.b16 %v1761
        %v1818 = vunpack.c.l.b16 %v1762
        %v1819 = vunpack.c.l.b16 %v1763
        %v1820 = vunpack.c.l.b16 %v1764
        %v1821 = vpack.c.b16 %v1806, %v1805
        %v1822 = vpack.c.b16 %v1808, %v1807
        %v1823 = vpack.c.b16 %v1810, %v1809
        %v1824 = vpack.c.b16 %v1812, %v1811
        %v1825 = vpack.c.b16 %v1814, %v1813
        %v1826 = vpack.c.b16 %v1816, %v1815
        %v1827 = vpack.c.b16 %v1818, %v1817
        %v1828 = vpack.c.b16 %v1820, %v1819
        %1837 = vmatprep.subr.bf16.mxu0 0
        %1838 = vmatpush1.bf16.msra.mxu0 %v1821
        %1839 = vmatprep.subr.bf16.mxu0 0
        %1840 = vmatpush1.bf16.msra.mxu0 %v1822
        %1841 = vmatprep.subr.bf16.mxu0 0
        %1842 = vmatpush1.bf16.msra.mxu0 %v1823
        %1843 = vmatprep.subr.bf16.mxu0 0
        %1844 = vmatpush1.bf16.msra.mxu0 %v1824
        %1845 = vmatprep.subr.bf16.mxu0 0
        %1846 = vmatpush1.bf16.msra.mxu0 %v1825
        %1847 = vmatprep.subr.bf16.mxu0 0
        %1848 = vmatpush1.bf16.msra.mxu0 %v1826
        %1849 = vmatprep.subr.bf16.mxu0 0
        %1850 = vmatpush1.bf16.msra.mxu0 %v1827
        %1851 = vmatprep.subr.bf16.mxu0 0
        %1852 = vmatpush1.bf16.msra.mxu0 %v1828
        %1853 = vmatprep.subr.bf16.mxu0 0
        %1854 = vmatpush1.bf16.msra.mxu0 0
        %1855 = vmatprep.subr.bf16.mxu0 0
        %1856 = vmatpush1.bf16.msra.mxu0 0
        %1857 = vmatprep.subr.bf16.mxu0 0
        %1858 = vmatpush1.bf16.msra.mxu0 0
        %1859 = vmatprep.subr.bf16.mxu0 0
        %1860 = vmatpush1.bf16.msra.mxu0 0
        %1861 = vmatprep.subr.bf16.mxu0 0
        %1862 = vmatpush1.bf16.msra.mxu0 0
        %1863 = vmatprep.subr.bf16.mxu0 0
        %1864 = vmatpush1.bf16.msra.mxu0 0
        %1865 = vmatprep.subr.bf16.mxu0 0
        %1866 = vmatpush1.bf16.msra.mxu0 0
        %1867 = vmatprep.subr.bf16.mxu0 0
        %1868 = vmatpush1.bf16.msra.mxu0 0
        %1869 = vmatprep.mubr.bf16.mxu0 0
        %1870 = vmatmul.mubr.bf16.gmra.mrb[0].mxu0 %v1781
        %v1871 = vpop.f32.mrb[0].mxu0
        %v1872 = vadd.f32 0.0, %v1871
        %v1873 = vpop.f32.mrb[0].mxu0
        %v1874 = vpop.f32.mrb[0].mxu0
        %v1875 = vadd.f32 0.0, %v1874
        %v1876 = vpop.f32.mrb[0].mxu0
        %1877 = vmatprep.mubr.bf16.mxu0 0
        %1878 = vmatmul.mubr.bf16.gmra.mrb[0].mxu0 %v1782
        %v1879 = vpop.f32.mrb[0].mxu0
        %v1880 = vadd.f32 0.0, %v1879
        %v1881 = vpop.f32.mrb[0].mxu0
        %v1882 = vpop.f32.mrb[0].mxu0
        %v1883 = vadd.f32 0.0, %v1882
        %v1884 = vpop.f32.mrb[0].mxu0
        %1885 = vmatprep.mubr.bf16.mxu0 0
        %1886 = vmatmul.mubr.bf16.gmra.mrb[0].mxu0 %v1783
        %v1887 = vpop.f32.mrb[0].mxu0
        %v1888 = vadd.f32 0.0, %v1887
        %v1889 = vpop.f32.mrb[0].mxu0
        %v1890 = vpop.f32.mrb[0].mxu0
        %v1891 = vadd.f32 0.0, %v1890
        %v1892 = vpop.f32.mrb[0].mxu0
        %1893 = vmatprep.mubr.bf16.mxu0 0
        %1894 = vmatmul.mubr.bf16.gmra.mrb[0].mxu0 %v1784
        %v1895 = vpop.f32.mrb[0].mxu0
        %v1896 = vadd.f32 0.0, %v1895
        %v1897 = vpop.f32.mrb[0].mxu0
        %v1898 = vpop.f32.mrb[0].mxu0
        %v1899 = vadd.f32 0.0, %v1898
        %v1900 = vpop.f32.mrb[0].mxu0
        %1901 = vdwg.mxu0
        %v1902 = vadd.f32 %v1721, %v1872
        %v1903 = vadd.f32 %v1722, %v1875
        %v1904 = vadd.f32 %v1723, %v1880
        %v1905 = vadd.f32 %v1724, %v1883
        %v1906 = vadd.f32 %v1725, %v1888
        %v1907 = vadd.f32 %v1726, %v1891
        %v1908 = vadd.f32 %v1727, %v1896
        %v1909 = vadd.f32 %v1728, %v1899
        %v1910 = vmax.f32 %v1902, 0.0
        %v1911 = vmax.f32 %v1903, 0.0
        %v1912 = vmax.f32 %v1904, 0.0
        %v1913 = vmax.f32 %v1905, 0.0
        %v1914 = vmax.f32 %v1906, 0.0
        %v1915 = vmax.f32 %v1907, 0.0
        %v1916 = vmax.f32 %v1908, 0.0
        %v1917 = vmax.f32 %v1909, 0.0
        %v1918 = vpack.c.bf16 %v1911, %v1910
        %v1919 = vpack.c.bf16 %v1913, %v1912
        %v1920 = vpack.c.bf16 %v1915, %v1914
        %v1921 = vpack.c.bf16 %v1917, %v1916
        %s1922 = smul.u32 %s26, 16
        %s1923 = smul.addr %s1922, 4
        %s1924 = scalar_lea.vmem [#allocation9], %s1923
        %v1925 = vld [vmem:[%s1924] sm:$0xf]
        %v1926 = vld [vmem:[%s1924 + $0x4] sm:$0xf]
        %v1927 = vld [vmem:[%s1924 + $0x8] sm:$0xf]
        %v1928 = vld [vmem:[%s1924 + $0xc] sm:$0xf]
        %v1929 = vld [vmem:[%s1924 + $0x10] sm:$0xf]
        %v1930 = vld [vmem:[%s1924 + $0x14] sm:$0xf]
        %v1931 = vld [vmem:[%s1924 + $0x18] sm:$0xf]
        %v1932 = vld [vmem:[%s1924 + $0x1c] sm:$0xf]
        %v1933 = vld [vmem:[%s1924 + $0x20] sm:$0xf]
        %v1934 = vld [vmem:[%s1924 + $0x24] sm:$0xf]
        %v1935 = vld [vmem:[%s1924 + $0x28] sm:$0xf]
        %v1936 = vld [vmem:[%s1924 + $0x2c] sm:$0xf]
        %v1937 = vld [vmem:[%s1924 + $0x30] sm:$0xf]
        %v1938 = vld [vmem:[%s1924 + $0x34] sm:$0xf]
        %v1939 = vld [vmem:[%s1924 + $0x38] sm:$0xf]
        %v1940 = vld [vmem:[%s1924 + $0x3c] sm:$0xf]
        %v1957 = vunpack.c.l.b16 %v1925
        %v1958 = vunpack.c.l.b16 %v1926
        %v1959 = vunpack.c.l.b16 %v1927
        %v1960 = vunpack.c.l.b16 %v1928
        %v1961 = vunpack.c.l.b16 %v1929
        %v1962 = vunpack.c.l.b16 %v1930
        %v1963 = vunpack.c.l.b16 %v1931
        %v1964 = vunpack.c.l.b16 %v1932
        %v1965 = vunpack.c.l.b16 %v1933
        %v1966 = vunpack.c.l.b16 %v1934
        %v1967 = vunpack.c.l.b16 %v1935
        %v1968 = vunpack.c.l.b16 %v1936
        %v1969 = vunpack.c.l.b16 %v1937
        %v1970 = vunpack.c.l.b16 %v1938
        %v1971 = vunpack.c.l.b16 %v1939
        %v1972 = vunpack.c.l.b16 %v1940
        %v1973 = vpack.c.b16 %v1958, %v1957
        %v1974 = vpack.c.b16 %v1960, %v1959
        %v1975 = vpack.c.b16 %v1962, %v1961
        %v1976 = vpack.c.b16 %v1964, %v1963
        %v1977 = vpack.c.b16 %v1966, %v1965
        %v1978 = vpack.c.b16 %v1968, %v1967
        %v1979 = vpack.c.b16 %v1970, %v1969
        %v1980 = vpack.c.b16 %v1972, %v1971
        %1989 = vmatprep.subr.bf16.mxu0 0
        %1990 = vmatpush1.bf16.msra.mxu0 %v1973
        %1991 = vmatprep.subr.bf16.mxu0 0
        %1992 = vmatpush1.bf16.msra.mxu0 %v1974
        %1993 = vmatprep.subr.bf16.mxu0 0
        %1994 = vmatpush1.bf16.msra.mxu0 %v1975
        %1995 = vmatprep.subr.bf16.mxu0 0
        %1996 = vmatpush1.bf16.msra.mxu0 %v1976
        %1997 = vmatprep.subr.bf16.mxu0 0
        %1998 = vmatpush1.bf16.msra.mxu0 %v1977
        %1999 = vmatprep.subr.bf16.mxu0 0
        %2000 = vmatpush1.bf16.msra.mxu0 %v1978
        %2001 = vmatprep.subr.bf16.mxu0 0
        %2002 = vmatpush1.bf16.msra.mxu0 %v1979
        %2003 = vmatprep.subr.bf16.mxu0 0
        %2004 = vmatpush1.bf16.msra.mxu0 %v1980
        %2005 = vmatprep.subr.bf16.mxu0 0
        %2006 = vmatpush1.bf16.msra.mxu0 0
        %2007 = vmatprep.subr.bf16.mxu0 0
        %2008 = vmatpush1.bf16.msra.mxu0 0
        %2009 = vmatprep.subr.bf16.mxu0 0
        %2010 = vmatpush1.bf16.msra.mxu0 0
        %2011 = vmatprep.subr.bf16.mxu0 0
        %2012 = vmatpush1.bf16.msra.mxu0 0
        %2013 = vmatprep.subr.bf16.mxu0 0
        %2014 = vmatpush1.bf16.msra.mxu0 0
        %2015 = vmatprep.subr.bf16.mxu0 0
        %2016 = vmatpush1.bf16.msra.mxu0 0
        %2017 = vmatprep.subr.bf16.mxu0 0
        %2018 = vmatpush1.bf16.msra.mxu0 0
        %2019 = vmatprep.subr.bf16.mxu0 0
        %2020 = vmatpush1.bf16.msra.mxu0 0
        %2021 = vmatprep.mubr.bf16.mxu0 0
        %2022 = vmatmul.mubr.bf16.gmra.mrb[0].mxu0 %v1918
        %v2023 = vpop.f32.mrb[0].mxu0
        %v2024 = vadd.f32 0.0, %v2023
        %v2025 = vpop.f32.mrb[0].mxu0
        %v2026 = vpop.f32.mrb[0].mxu0
        %v2027 = vadd.f32 0.0, %v2026
        %v2028 = vpop.f32.mrb[0].mxu0
        %2029 = vmatprep.mubr.bf16.mxu0 0
        %2030 = vmatmul.mubr.bf16.gmra.mrb[0].mxu0 %v1919
        %v2031 = vpop.f32.mrb[0].mxu0
        %v2032 = vadd.f32 0.0, %v2031
        %v2033 = vpop.f32.mrb[0].mxu0
        %v2034 = vpop.f32.mrb[0].mxu0
        %v2035 = vadd.f32 0.0, %v2034
        %v2036 = vpop.f32.mrb[0].mxu0
        %2037 = vmatprep.mubr.bf16.mxu0 0
        %2038 = vmatmul.mubr.bf16.gmra.mrb[0].mxu0 %v1920
        %v2039 = vpop.f32.mrb[0].mxu0
        %v2040 = vadd.f32 0.0, %v2039
        %v2041 = vpop.f32.mrb[0].mxu0
        %v2042 = vpop.f32.mrb[0].mxu0
        %v2043 = vadd.f32 0.0, %v2042
        %v2044 = vpop.f32.mrb[0].mxu0
        %2045 = vmatprep.mubr.bf16.mxu0 0
        %2046 = vmatmul.mubr.bf16.gmra.mrb[0].mxu0 %v1921
        %v2047 = vpop.f32.mrb[0].mxu0
        %v2048 = vadd.f32 0.0, %v2047
        %v2049 = vpop.f32.mrb[0].mxu0
        %v2050 = vpop.f32.mrb[0].mxu0
        %v2051 = vadd.f32 0.0, %v2050
        %v2052 = vpop.f32.mrb[0].mxu0
        %2053 = vdwg.mxu0
        %v2054 = vadd.f32 %v271, %v2024
        %v2055 = vadd.f32 %v272, %v2027
        %v2056 = vadd.f32 %v273, %v2032
        %v2057 = vadd.f32 %v274, %v2035
        %v2058 = vadd.f32 %v275, %v2040
        %v2059 = vadd.f32 %v276, %v2043
        %v2060 = vadd.f32 %v277, %v2048
        %v2061 = vadd.f32 %v278, %v2051
        %2062 = vst [vmem:[#allocation2] sm:$0xff] %v2054
        %2063 = vst [vmem:[#allocation2 + $0x8] sm:$0xff] %v2055
        %2064 = vst [vmem:[#allocation2 + $0x10] sm:$0xff] %v2056
        %2065 = vst [vmem:[#allocation2 + $0x18] sm:$0xff] %v2057
        %2066 = vst [vmem:[#allocation2 + $0x20] sm:$0xff] %v2058
        %2067 = vst [vmem:[#allocation2 + $0x28] sm:$0xff] %v2059
        %2068 = vst [vmem:[#allocation2 + $0x30] sm:$0xff] %v2060
        %2069 = vst [vmem:[#allocation2 + $0x38] sm:$0xff] %v2061
        %p2070 = scmp.eq.s32.totalorder %s26, 1
        // Predicated region
        $region49: #{tpu_custom_call.1} parent=31 // pred_check
          %p2071 = pneg %p2070
        $region50: #{tpu_custom_call.1} parent=31 // pred_check_branch
          %2073 = sbr.rel (%p2071) target = $region52
        $region51: #{tpu_custom_call.1} parent=31 // pred_region
          %v2074 = vmax.f32 %v2054, 0.0
          %v2075 = vmax.f32 %v2055, 0.0
          %v2076 = vmax.f32 %v2056, 0.0
          %v2077 = vmax.f32 %v2057, 0.0
          %v2078 = vmax.f32 %v2058, 0.0
          %v2079 = vmax.f32 %v2059, 0.0
          %v2080 = vmax.f32 %v2060, 0.0
          %v2081 = vmax.f32 %v2061, 0.0
          %2082 = vst [vmem:[%s229] sm:$0xff] %v2074
          %2083 = vst [vmem:[%s229 + $0x8] sm:$0xff] %v2075
          %2084 = vst [vmem:[%s229 + $0x10] sm:$0xff] %v2076
          %2085 = vst [vmem:[%s229 + $0x18] sm:$0xff] %v2077
          %2086 = vst [vmem:[%s229 + $0x20] sm:$0xff] %v2078
          %2087 = vst [vmem:[%s229 + $0x28] sm:$0xff] %v2079
          %2088 = vst [vmem:[%s229 + $0x30] sm:$0xff] %v2080
          %2089 = vst [vmem:[%s229 + $0x38] sm:$0xff] %v2081
        $region52: #{tpu_custom_call.1} parent=31 // pred_fallthru
          _
        %s2090 = sand.u32 %s109, 1
        %s2091 = scalar_lea.sflag [#allocation6], %s2090
        %s2092 = sand.u32 %s109, 1
        %s2093 = smul.addr %s2092, 64
        %s2094 = scalar_lea.vmem [#allocation10], %s2093
        // Predicated region
        $region53: #{tpu_custom_call.1} parent=31 // pred_check
          %p2095 = pneg %p119
        $region54: #{tpu_custom_call.1} parent=31 // pred_check_branch
          %2097 = sbr.rel (%p2095) target = $region56
        $region55: #{tpu_custom_call.1} parent=31 // pred_region
          %s2099 = ssub.s32 1024, 1024
          %2100 = vsyncadd %s2091, %s2099
          %s2101 = smul.addr %s25, 8
          %s2102 = smul.addr %s2101, 128
          %s2103 = scalar_lea.hbm %s3, %s2102
          %s2104 = sshll.u32 %s2094, 4
          %s2105 = int_to_ptr.vmem [resolvable:$true] %s2104
          %2110 = dma.vmem_to_hbm [thread:$0]  %s2105, 1024, %s2103, %s2091, 128, 128, 8
        $region56: #{tpu_custom_call.1} parent=31 // pred_fallthru
          _
      $region32: #{tpu_custom_call.1} parent=5 // pred_fallthru
        _
      %p2111 = scmp.le.s32.totalorder 2, %s16
      // Predicated region
      $region57: #{tpu_custom_call.1} parent=5 // pred_check
        %p2112 = pneg %p2111
      $region58: #{tpu_custom_call.1} parent=5 // pred_check_branch
        %2114 = sbr.rel (%p2112) target = $region60
      $region59: #{tpu_custom_call.1} parent=5 // pred_region
        %s2115 = ssub.s32 %s16, 2
        // Predicated region
        $region61: #{tpu_custom_call.1} parent=59 // pred_check
          %p2116 = pneg %p125
        $region62: #{tpu_custom_call.1} parent=59 // pred_check_branch
          %2118 = sbr.rel (%p2116) target = $region64
        $region63: #{tpu_custom_call.1} parent=59 // pred_region
          %s2119 = sand.u32 %s110, 1
          %s2120 = scalar_lea.sflag [#allocation6], %s2119
          %s2121 = sand.u32 %s110, 1
          %s2122 = smul.addr %s2121, 64
          %s2123 = scalar_lea.vmem [#allocation10], %s2122
          %2124 = dma.done %s2120, 1024
        $region64: #{tpu_custom_call.1} parent=59 // pred_fallthru
          _
      $region60: #{tpu_custom_call.1} parent=5 // pred_fallthru
        _
    $region6: #{tpu_custom_call.1} parent=1 // loop_footer
      %s20 = sadd.s32 1, %s16
    $region7: #{tpu_custom_call.1} parent=1 // loop_footer_branch
      %15 = sbr.rel target = $region3
    $region8: #{tpu_custom_call.1} parent=1 // loop_exit
      _
    %2125 = vsyncpa [#allocation5], 1
    %s2126 = scalar_lea.sflag [#allocation5], 1
    %2127 = vsyncpa %s2126, 1
    %2128 = vsyncpa [#allocation8], 1
    %2129 = vsyncpa [#allocation6], 1
    %s2130 = scalar_lea.sflag [#allocation6], 1
    %2131 = vsyncpa %s2130, 1

</llo_original>
